<compile_context>
chip_gen: v5e
topology: v5e:2x2
jax: 0.10.0
libtpu: 0.0.40
codegen_flags: <defaults>
</compile_context>

<pallas_src>
import math
import functools

import jax
import jax.numpy as jnp
import numpy as np
from jax.experimental import pallas as pl
from jax.experimental.pallas import tpu as pltpu

EPS = 1e-5


def _round_up(x, m):
    return (x + m - 1) // m * m


def _vmem_limit_bytes():
    """Per-generation scoped-VMEM budget: ~75% of physical, 32 MiB floor."""
    try:
        cap = int(pltpu.get_tpu_info().vmem_capacity_bytes)
    except Exception:  # interpret mode / older runtimes
        cap = 128 * 1024 * 1024
    return max(32 * 1024 * 1024, min(cap * 3 // 4, 100 * 1024 * 1024))


# ------------------------------ Pallas kernels -------------------------------

def _layer_kernel(B, T, H, hd,
                  x_ref, n1_ref, wq_ref, wk_ref, wv_ref, wo_ref,
                  cos_ref, sin_ref, n2_ref, w1_ref, w2_ref, w3_ref, o_ref):
    """One fused transformer layer on the flattened (B*T, D) activation:
       RMSNorm -> QKV -> RoPE -> causal MHA -> out-proj -> +residual
       -> RMSNorm -> SwiGLU FFN -> +residual."""
    D = H * hd
    half = hd // 2
    x = x_ref[...]                                       # (B*T, D) f32 residual

    # --- RMSNorm 1 (f32, rsqrt on EUP) ---
    ms = jnp.mean(x * x, axis=-1, keepdims=True)
    xb = (x * jax.lax.rsqrt(ms + EPS) * n1_ref[...]).astype(jnp.bfloat16)

    # --- QKV projections: single (B*T)-row MXU matmuls, f32 accumulate.
    #     1/sqrt(hd) is pre-folded into wq (no (T,T) scale multiply later). ---
    q = jnp.dot(xb, wq_ref[...], preferred_element_type=jnp.float32)
    k = jnp.dot(xb, wk_ref[...], preferred_element_type=jnp.float32)
    v = jnp.dot(xb, wv_ref[...], preferred_element_type=jnp.float32)

    # --- split into (B*H, T, hd) head groups.
    # TODO(synk): at real Llama sizes (hd = 128, lane-dense) replace this
    # static slice/stack with pltpu.einshape / a lane-dense reshape; here
    # hd = 32 (< one lane tile) so the slice form is the lowering-safe choice.
    def split_heads(t):
        return jnp.stack(
            [t[b * T:(b + 1) * T, h * hd:(h + 1) * hd]
             for b in range(B) for h in range(H)], axis=0)
    qh, kh, vh = split_heads(q), split_heads(k), split_heads(v)

    # --- RoPE for all (batch, head) groups at once; rotate-half sign is
    #     pre-folded into sin_ref.
    # TODO(synk): with hd a multiple of 128 this becomes one
    # pltpu.roll(t, shift=hd//2, axis=-1) on the (mostly idle) XLU slot.
    cos = cos_ref[...]                                   # (T, hd)
    sinr = sin_ref[...]                                  # (T, hd), 1st half negated

    def rope(t):
        rolled = jnp.concatenate([t[..., half:], t[..., :half]], axis=-1)
        return t * cos + rolled * sinr
    qh = rope(qh)
    kh = rope(kh)

    # --- causal attention, batched over all B*H groups (no per-head loop). ---
    s = jnp.einsum('gtd,gsd->gts',
                   qh.astype(jnp.bfloat16), kh.astype(jnp.bfloat16),
                   preferred_element_type=jnp.float32)   # (B*H, T, T)
    row = jax.lax.broadcasted_iota(jnp.int32, (1, T, T), 1)
    col = jax.lax.broadcasted_iota(jnp.int32, (1, T, T), 2)
    s = jnp.where(col > row, -jnp.inf, s)                # diagonal never masked
    m = jnp.max(s, axis=-1, keepdims=True)
    p = jnp.exp(s - m)                                   # unnormalised probs
    l = jnp.sum(p, axis=-1, keepdims=True)
    ctx = jnp.einsum('gts,gsd->gtd',
                     p.astype(jnp.bfloat16), vh.astype(jnp.bfloat16),
                     preferred_element_type=jnp.float32)  # (B*H, T, hd)
    # Normalise AFTER the PV matmul: (G,T,hd) multiplies instead of (G,T,T).
    ctx = ctx * pl.reciprocal(l, approx=True)
    # TODO(synk): at production T the score/PV path becomes a flash-style
    # online-softmax loop over KV tiles (m/l/acc VMEM scratch).

    # --- merge heads back to (B*T, D); out-projection + residual. ---
    ctx2d = jnp.concatenate(
        [jnp.concatenate([ctx[b * H + h] for h in range(H)], axis=-1)
         for b in range(B)], axis=0)                     # (B*T, D)
    x = jnp.dot(ctx2d.astype(jnp.bfloat16), wo_ref[...],
                preferred_element_type=jnp.float32) + x

    # --- RMSNorm 2 + SwiGLU FFN + residual, still on (B*T, D). ---
    ms2 = jnp.mean(x * x, axis=-1, keepdims=True)
    xb2 = (x * jax.lax.rsqrt(ms2 + EPS) * n2_ref[...]).astype(jnp.bfloat16)
    a1 = jnp.dot(xb2, w1_ref[...], preferred_element_type=jnp.float32)
    a2 = jnp.dot(xb2, w2_ref[...], preferred_element_type=jnp.float32)
    hff = (a1 * jax.nn.sigmoid(a1)) * a2                 # SiLU * gate in f32
    o_ref[...] = jnp.dot(hff.astype(jnp.bfloat16), w3_ref[...],
                         preferred_element_type=jnp.float32) + x


def _final_head_kernel(x_ref, nw_ref, w_ref, o_ref, xn_ref):
    """Final RMSNorm (hoisted) + lm-head matmul.

    Grid = (row tiles [parallel], vocab tiles [arbitrary, innermost]).  The
    normed bf16 row tile is cached in VMEM scratch at j == 0 and re-used for
    every vocab tile of that row tile, so rsqrt/mul work is paid once per row
    tile instead of once per (row, vocab) tile.
    """
    @pl.when(pl.program_id(1) == 0)
    def _():
        x = x_ref[...]                                   # (TN, D) f32
        ms = jnp.mean(x * x, axis=-1, keepdims=True)
        xn_ref[...] = (x * jax.lax.rsqrt(ms + EPS) * nw_ref[...]).astype(jnp.bfloat16)

    o_ref[...] = jnp.dot(xn_ref[...], w_ref[...],
                         preferred_element_type=jnp.float32)


# -------------------------------- wrappers -----------------------------------

def transformer_layer(x2d, blk, cos, sin_rot, B, T, num_heads, vmem_limit):
    N, D = x2d.shape
    Hd = blk["w1"].shape[1]
    hd = D // num_heads
    kern = functools.partial(_layer_kernel, B, T, num_heads, hd)
    # Whole-array blocks: at these toy sizes every operand fits VMEM directly.
    # TODO(synk): at production sizes add "arbitrary" reduction grid axes over
    # D / Hd (f32 VMEM accumulators) plus MXU-height row tiling so resident
    # weight tiles + double buffers stay inside the per-generation VMEM budget
    # (v7x: 64 MiB physical).
    return pl.pallas_call(
        kern,
        out_shape=jax.ShapeDtypeStruct((N, D), jnp.float32),
        grid=(1,),
        in_specs=[pl.BlockSpec((N, D), lambda i: (0, 0)),
                  pl.BlockSpec((1, D), lambda i: (0, 0)),
                  pl.BlockSpec((D, D), lambda i: (0, 0)),
                  pl.BlockSpec((D, D), lambda i: (0, 0)),
                  pl.BlockSpec((D, D), lambda i: (0, 0)),
                  pl.BlockSpec((D, D), lambda i: (0, 0)),
                  pl.BlockSpec((T, hd), lambda i: (0, 0)),
                  pl.BlockSpec((T, hd), lambda i: (0, 0)),
                  pl.BlockSpec((1, D), lambda i: (0, 0)),
                  pl.BlockSpec((D, Hd), lambda i: (0, 0)),
                  pl.BlockSpec((D, Hd), lambda i: (0, 0)),
                  pl.BlockSpec((Hd, D), lambda i: (0, 0))],
        out_specs=pl.BlockSpec((N, D), lambda i: (0, 0)),
        compiler_params=pltpu.CompilerParams(
            dimension_semantics=("arbitrary",),
            vmem_limit_bytes=vmem_limit),
    )(x2d, blk["norm1_w"], blk["wq"], blk["wk"], blk["wv"], blk["wo"],
      cos, sin_rot, blk["norm2_w"], blk["w1"], blk["w2"], blk["w3"])


def final_norm_head(x2d, norm_w, w_out_bf16, vmem_limit,
                    tile_rows=256, tile_v=512):
    N, D = x2d.shape
    V = w_out_bf16.shape[1]
    TN = min(tile_rows, _round_up(N, 8))
    TV = min(tile_v, _round_up(V, 128))
    Np, Vp = _round_up(N, TN), _round_up(V, TV)
    if Np != N:                                          # remainder rows -> pad
        x2d = jnp.pad(x2d, ((0, Np - N), (0, 0)))
    if Vp != V:                                          # remainder vocab -> pad
        w_out_bf16 = jnp.pad(w_out_bf16, ((0, 0), (0, Vp - V)))
    out = pl.pallas_call(
        _final_head_kernel,
        out_shape=jax.ShapeDtypeStruct((Np, Vp), jnp.float32),
        grid=(Np // TN, Vp // TV),                       # vocab axis innermost
        in_specs=[pl.BlockSpec((TN, D), lambda i, j: (i, 0)),
                  pl.BlockSpec((1, D), lambda i, j: (0, 0)),
                  pl.BlockSpec((D, TV), lambda i, j: (0, j))],
        out_specs=pl.BlockSpec((TN, TV), lambda i, j: (i, j)),
        scratch_shapes=[pltpu.VMEM((TN, D), jnp.bfloat16)],
        compiler_params=pltpu.CompilerParams(
            # rows "parallel" (v7x: split across both TensorCores); vocab must
            # stay "arbitrary" so the j==0 hoisted-norm scratch is valid.
            dimension_semantics=("parallel", "arbitrary"),
            vmem_limit_bytes=vmem_limit),
    )(x2d, norm_w, w_out_bf16)
    return out[:N, :V]


# --------------------------- parameter construction --------------------------

def precompute_rope_params(head_dim, theta_base=10000.0, context_length=4096):
    inv_freq = 1.0 / theta_base ** (
        jnp.arange(head_dim // 2, dtype=jnp.float32) / (head_dim // 2))
    positions = jnp.arange(context_length, dtype=jnp.float32)
    angles = positions[:, None] * inv_freq[None, :]
    angles = jnp.concatenate([angles, angles], axis=1)
    return jnp.cos(angles), jnp.sin(angles)


def init_params(cfg, key):
    D, Hd, V = cfg["emb_dim"], cfg["hidden_dim"], cfg["vocab_size"]
    scale = 0.02

    def nrm(k, shape):
        return scale * jax.random.normal(k, shape, dtype=jnp.float32)

    keys = jax.random.split(key, 2 + cfg["n_layers"])
    params = {
        "tok_emb": nrm(keys[0], (V, D)),
        "w_out": nrm(keys[1], (D, V)),
        "final_norm_w": jnp.ones((D,), jnp.float32),
        "blocks": [],
    }
    head_dim = D // cfg["n_heads"]
    cos, sin = precompute_rope_params(head_dim, context_length=cfg["context_length"])
    params["cos"], params["sin"] = cos, sin

    for li in range(cfg["n_layers"]):
        bk = jax.random.split(keys[2 + li], 7)
        params["blocks"].append({
            "wq": nrm(bk[0], (D, D)),
            "wk": nrm(bk[1], (D, D)),
            "wv": nrm(bk[2], (D, D)),
            "wo": nrm(bk[3], (D, D)),
            "w1": nrm(bk[4], (D, Hd)),
            "w2": nrm(bk[5], (D, Hd)),
            "w3": nrm(bk[6], (Hd, D)),
            "norm1_w": jnp.ones((D,), jnp.float32),
            "norm2_w": jnp.ones((D,), jnp.float32),
        })
    return params


def prepare_fast_params(params, cfg):
    """One-time prep: bf16 weight copies, 1/sqrt(hd) folded into wq,
    rotate-half sign folded into sin, norm weights pre-reshaped to (1, D)."""
    D = cfg["emb_dim"]
    hd = D // cfg["n_heads"]
    half = hd // 2
    qscale = 1.0 / math.sqrt(hd)
    sign = jnp.concatenate([-jnp.ones((half,), jnp.float32),
                            jnp.ones((half,), jnp.float32)])
    fast = {
        "tok_emb": params["tok_emb"],
        "final_norm_w": params["final_norm_w"].reshape(1, D),
        "w_out": params["w_out"].astype(jnp.bfloat16),
        "cos": params["cos"],
        "sin_rot": params["sin"] * sign[None, :],
        "blocks": [],
    }
    for blk in params["blocks"]:
        fast["blocks"].append({
            "norm1_w": blk["norm1_w"].reshape(1, D),
            "norm2_w": blk["norm2_w"].reshape(1, D),
            "wq": (blk["wq"] * qscale).astype(jnp.bfloat16),
            "wk": blk["wk"].astype(jnp.bfloat16),
            "wv": blk["wv"].astype(jnp.bfloat16),
            "wo": blk["wo"].astype(jnp.bfloat16),
            "w1": blk["w1"].astype(jnp.bfloat16),
            "w2": blk["w2"].astype(jnp.bfloat16),
            "w3": blk["w3"].astype(jnp.bfloat16),
        })
    return fast


# -------------------------------- forward pass --------------------------------

def llama2_forward(fast, in_idx, cfg):
    B, T = in_idx.shape
    V = cfg["vocab_size"]
    vmem = _vmem_limit_bytes()
    # Token-embedding gather stays as plain-JAX glue outside the kernels.
    x = jnp.take(fast["tok_emb"], in_idx.reshape(-1), axis=0)      # (B*T, D)
    cos = fast["cos"][:T]
    sin_rot = fast["sin_rot"][:T]
    for blk in fast["blocks"]:
        x = transformer_layer(x, blk, cos, sin_rot, B, T, cfg["n_heads"], vmem)
    logits = final_norm_head(x, fast["final_norm_w"], fast["w_out"], vmem)
    return logits.reshape(B, T, V)


# --------------------------- pure-JAX f32 reference ---------------------------

def llama2_reference(params, in_idx, cfg):
    B, T = in_idx.shape
    D = cfg["emb_dim"]
    H = cfg["n_heads"]
    hd = D // H
    x = jnp.take(params["tok_emb"], in_idx, axis=0)
    cos = params["cos"][:T]
    sin = params["sin"][:T]

    def rms(x, w):
        ms = jnp.mean(x * x, axis=-1, keepdims=True)
        return x * jax.lax.rsqrt(ms + EPS) * w

    def rope(t):                                     # (B, H, T, hd)
        half = hd // 2
        t1, t2 = t[..., :half], t[..., half:]
        rot = jnp.concatenate([-t2, t1], axis=-1)
        return t * cos[None, None] + rot * sin[None, None]

    mask = jnp.triu(jnp.ones((T, T), bool), k=1)
    for layer in params["blocks"]:
        sc = x
        xn = rms(x, layer["norm1_w"])
        q = (xn @ layer["wq"]).reshape(B, T, H, hd).transpose(0, 2, 1, 3)
        k = (xn @ layer["wk"]).reshape(B, T, H, hd).transpose(0, 2, 1, 3)
        v = (xn @ layer["wv"]).reshape(B, T, H, hd).transpose(0, 2, 1, 3)
        q, k = rope(q), rope(k)
        s = jnp.einsum("bhqd,bhkd->bhqk", q, k) / math.sqrt(hd)
        s = jnp.where(mask, -jnp.inf, s)
        p = jax.nn.softmax(s, axis=-1)
        ctx = jnp.einsum("bhqk,bhkd->bhqd", p, v).transpose(0, 2, 1, 3).reshape(B, T, D)
        x = ctx @ layer["wo"] + sc
        sc = x
        xn = rms(x, layer["norm2_w"])
        a = xn @ layer["w1"]
        b = xn @ layer["w2"]
        x = ((a * jax.nn.sigmoid(a)) * b) @ layer["w3"] + sc
    x = rms(x, params["final_norm_w"])
    return x @ params["w_out"]


# ------------------------------------ main ------------------------------------

if __name__ == "__main__":
    cfg = {
        "vocab_size": 256,
        "emb_dim": 128,
        "hidden_dim": 256,
        "n_heads": 4,
        "n_layers": 2,
        "context_length": 16,
        "dtype": jnp.float32,
    }
    key = jax.random.PRNGKey(0)
    pkey, ikey = jax.random.split(key)
    params = init_params(cfg, pkey)
    fast = prepare_fast_params(params, cfg)

    B, T = 2, 8
    in_idx = jax.random.randint(ikey, (B, T), 0, cfg["vocab_size"], dtype=jnp.int32)

    logits = llama2_forward(fast, in_idx, cfg)
    logits = jax.block_until_ready(logits)

    ref = jax.block_until_ready(llama2_reference(params, in_idx, cfg))
    # bf16 MXU operands (+ approx softmax reciprocal) vs. pure-f32 reference.
    np.testing.assert_allclose(np.asarray(logits), np.asarray(ref), atol=1e-2, rtol=1e-2)

    print("KERNEL_OK")
</pallas_src>

<mosaic_0001>
module attributes {stable_mosaic.version = 11 : i64} {
  func.func @_layer_kernel(%arg0: i32, %arg1: memref<16x128xf32, #tpu.memory_space<vmem>>, %arg2: memref<1x128xf32, #tpu.memory_space<vmem>>, %arg3: memref<128x128xbf16, #tpu.memory_space<vmem>>, %arg4: memref<128x128xbf16, #tpu.memory_space<vmem>>, %arg5: memref<128x128xbf16, #tpu.memory_space<vmem>>, %arg6: memref<128x128xbf16, #tpu.memory_space<vmem>>, %arg7: memref<8x32xf32, #tpu.memory_space<vmem>>, %arg8: memref<8x32xf32, #tpu.memory_space<vmem>>, %arg9: memref<1x128xf32, #tpu.memory_space<vmem>>, %arg10: memref<128x256xbf16, #tpu.memory_space<vmem>>, %arg11: memref<128x256xbf16, #tpu.memory_space<vmem>>, %arg12: memref<256x128xbf16, #tpu.memory_space<vmem>>, %arg13: memref<16x128xf32, #tpu.memory_space<vmem>>) attributes {dimension_semantics = [#tpu.dimension_semantics<arbitrary>], iteration_bounds = array<i64: 1>, scalar_prefetch = 0 : i64, scratch_operands = 0 : i64, tpu.core_type = #tpu.core_type<tc>, window_params = [{pipeline_mode = #tpu.pipeline_mode<synchronous>, transform_indices = @transform_0, window_bounds = array<i64: 16, 128>}, {pipeline_mode = #tpu.pipeline_mode<synchronous>, transform_indices = @transform_1, window_bounds = array<i64: 1, 128>}, {pipeline_mode = #tpu.pipeline_mode<synchronous>, transform_indices = @transform_2, window_bounds = array<i64: 128, 128>}, {pipeline_mode = #tpu.pipeline_mode<synchronous>, transform_indices = @transform_3, window_bounds = array<i64: 128, 128>}, {pipeline_mode = #tpu.pipeline_mode<synchronous>, transform_indices = @transform_4, window_bounds = array<i64: 128, 128>}, {pipeline_mode = #tpu.pipeline_mode<synchronous>, transform_indices = @transform_5, window_bounds = array<i64: 128, 128>}, {pipeline_mode = #tpu.pipeline_mode<synchronous>, transform_indices = @transform_6, window_bounds = array<i64: 8, 32>}, {pipeline_mode = #tpu.pipeline_mode<synchronous>, transform_indices = @transform_7, window_bounds = array<i64: 8, 32>}, {pipeline_mode = #tpu.pipeline_mode<synchronous>, transform_indices = @transform_8, window_bounds = array<i64: 1, 128>}, {pipeline_mode = #tpu.pipeline_mode<synchronous>, transform_indices = @transform_9, window_bounds = array<i64: 128, 256>}, {pipeline_mode = #tpu.pipeline_mode<synchronous>, transform_indices = @transform_10, window_bounds = array<i64: 128, 256>}, {pipeline_mode = #tpu.pipeline_mode<synchronous>, transform_indices = @transform_11, window_bounds = array<i64: 256, 128>}, {pipeline_mode = #tpu.pipeline_mode<synchronous>, transform_indices = @transform_12, window_bounds = array<i64: 16, 128>}]} {
    %c0 = arith.constant 0 : index
    %c0_0 = arith.constant 0 : index
    %0 = vector.load %arg1[%c0, %c0_0] : memref<16x128xf32, #tpu.memory_space<vmem>>, vector<16x128xf32>
    %1 = arith.mulf %0, %0 : vector<16x128xf32>
    %cst = arith.constant dense<0.000000e+00> : vector<16xf32>
    %2 = vector.multi_reduction <add>, %1, %cst [1] : vector<16x128xf32> to vector<16xf32>
    %3 = vector.shape_cast %2 : vector<16xf32> to vector<16x1xf32>
    %cst_1 = arith.constant 1.280000e+02 : f32
    %4 = vector.broadcast %cst_1 : f32 to vector<16x1xf32>
    %5 = arith.divf %3, %4 : vector<16x1xf32>
    %cst_2 = arith.constant 9.99999974E-6 : f32
    %6 = vector.broadcast %cst_2 : f32 to vector<16x1xf32>
    %7 = arith.addf %5, %6 : vector<16x1xf32>
    %8 = math.rsqrt %7 : vector<16x1xf32>
    %9 = vector.broadcast %8 : vector<16x1xf32> to vector<16x128xf32>
    %10 = arith.mulf %0, %9 : vector<16x128xf32>
    %c0_3 = arith.constant 0 : index
    %c0_4 = arith.constant 0 : index
    %11 = vector.load %arg2[%c0_3, %c0_4] : memref<1x128xf32, #tpu.memory_space<vmem>>, vector<1x128xf32>
    %12 = vector.broadcast %11 : vector<1x128xf32> to vector<16x128xf32>
    %13 = arith.mulf %10, %12 : vector<16x128xf32>
    %14 = arith.truncf %13 : vector<16x128xf32> to vector<16x128xbf16>
    %c0_5 = arith.constant 0 : index
    %c0_6 = arith.constant 0 : index
    %15 = vector.load %arg3[%c0_5, %c0_6] : memref<128x128xbf16, #tpu.memory_space<vmem>>, vector<128x128xbf16>
    %cst_7 = arith.constant dense<0.000000e+00> : vector<16x128xf32>
    %16 = tpu.matmul %14, %15, %cst_7 {dimension_numbers = #tpu.dot_dimension_numbers<[1], [0], [0], [1], [0, 0, 1, 1], [], []>} : vector<16x128xbf16>, vector<128x128xbf16>, vector<16x128xf32> -> vector<16x128xf32>
    %c0_8 = arith.constant 0 : index
    %c0_9 = arith.constant 0 : index
    %17 = vector.load %arg4[%c0_8, %c0_9] : memref<128x128xbf16, #tpu.memory_space<vmem>>, vector<128x128xbf16>
    %cst_10 = arith.constant dense<0.000000e+00> : vector<16x128xf32>
    %18 = tpu.matmul %14, %17, %cst_10 {dimension_numbers = #tpu.dot_dimension_numbers<[1], [0], [0], [1], [0, 0, 1, 1], [], []>} : vector<16x128xbf16>, vector<128x128xbf16>, vector<16x128xf32> -> vector<16x128xf32>
    %c0_11 = arith.constant 0 : index
    %c0_12 = arith.constant 0 : index
    %19 = vector.load %arg5[%c0_11, %c0_12] : memref<128x128xbf16, #tpu.memory_space<vmem>>, vector<128x128xbf16>
    %cst_13 = arith.constant dense<0.000000e+00> : vector<16x128xf32>
    %20 = tpu.matmul %14, %19, %cst_13 {dimension_numbers = #tpu.dot_dimension_numbers<[1], [0], [0], [1], [0, 0, 1, 1], [], []>} : vector<16x128xbf16>, vector<128x128xbf16>, vector<16x128xf32> -> vector<16x128xf32>
    %21 = vector.extract_strided_slice %16 {offsets = [0, 0], sizes = [8, 32], strides = [1, 1]} : vector<16x128xf32> to vector<8x32xf32>
    %22 = vector.extract_strided_slice %16 {offsets = [0, 32], sizes = [8, 32], strides = [1, 1]} : vector<16x128xf32> to vector<8x32xf32>
    %23 = vector.extract_strided_slice %16 {offsets = [0, 64], sizes = [8, 32], strides = [1, 1]} : vector<16x128xf32> to vector<8x32xf32>
    %24 = vector.extract_strided_slice %16 {offsets = [0, 96], sizes = [8, 32], strides = [1, 1]} : vector<16x128xf32> to vector<8x32xf32>
    %25 = vector.extract_strided_slice %16 {offsets = [8, 0], sizes = [8, 32], strides = [1, 1]} : vector<16x128xf32> to vector<8x32xf32>
    %26 = vector.extract_strided_slice %16 {offsets = [8, 32], sizes = [8, 32], strides = [1, 1]} : vector<16x128xf32> to vector<8x32xf32>
    %27 = vector.extract_strided_slice %16 {offsets = [8, 64], sizes = [8, 32], strides = [1, 1]} : vector<16x128xf32> to vector<8x32xf32>
    %28 = vector.extract_strided_slice %16 {offsets = [8, 96], sizes = [8, 32], strides = [1, 1]} : vector<16x128xf32> to vector<8x32xf32>
    %29 = vector.shape_cast %21 : vector<8x32xf32> to vector<1x8x32xf32>
    %30 = vector.shape_cast %22 : vector<8x32xf32> to vector<1x8x32xf32>
    %31 = vector.shape_cast %23 : vector<8x32xf32> to vector<1x8x32xf32>
    %32 = vector.shape_cast %24 : vector<8x32xf32> to vector<1x8x32xf32>
    %33 = vector.shape_cast %25 : vector<8x32xf32> to vector<1x8x32xf32>
    %34 = vector.shape_cast %26 : vector<8x32xf32> to vector<1x8x32xf32>
    %35 = vector.shape_cast %27 : vector<8x32xf32> to vector<1x8x32xf32>
    %36 = vector.shape_cast %28 : vector<8x32xf32> to vector<1x8x32xf32>
    %37 = tpu.concatenate %29, %30, %31, %32, %33, %34, %35, %36 in 0 : vector<1x8x32xf32>, vector<1x8x32xf32>, vector<1x8x32xf32>, vector<1x8x32xf32>, vector<1x8x32xf32>, vector<1x8x32xf32>, vector<1x8x32xf32>, vector<1x8x32xf32> -> vector<8x8x32xf32>
    %38 = vector.extract_strided_slice %18 {offsets = [0, 0], sizes = [8, 32], strides = [1, 1]} : vector<16x128xf32> to vector<8x32xf32>
    %39 = vector.extract_strided_slice %18 {offsets = [0, 32], sizes = [8, 32], strides = [1, 1]} : vector<16x128xf32> to vector<8x32xf32>
    %40 = vector.extract_strided_slice %18 {offsets = [0, 64], sizes = [8, 32], strides = [1, 1]} : vector<16x128xf32> to vector<8x32xf32>
    %41 = vector.extract_strided_slice %18 {offsets = [0, 96], sizes = [8, 32], strides = [1, 1]} : vector<16x128xf32> to vector<8x32xf32>
    %42 = vector.extract_strided_slice %18 {offsets = [8, 0], sizes = [8, 32], strides = [1, 1]} : vector<16x128xf32> to vector<8x32xf32>
    %43 = vector.extract_strided_slice %18 {offsets = [8, 32], sizes = [8, 32], strides = [1, 1]} : vector<16x128xf32> to vector<8x32xf32>
    %44 = vector.extract_strided_slice %18 {offsets = [8, 64], sizes = [8, 32], strides = [1, 1]} : vector<16x128xf32> to vector<8x32xf32>
    %45 = vector.extract_strided_slice %18 {offsets = [8, 96], sizes = [8, 32], strides = [1, 1]} : vector<16x128xf32> to vector<8x32xf32>
    %46 = vector.shape_cast %38 : vector<8x32xf32> to vector<1x8x32xf32>
    %47 = vector.shape_cast %39 : vector<8x32xf32> to vector<1x8x32xf32>
    %48 = vector.shape_cast %40 : vector<8x32xf32> to vector<1x8x32xf32>
    %49 = vector.shape_cast %41 : vector<8x32xf32> to vector<1x8x32xf32>
    %50 = vector.shape_cast %42 : vector<8x32xf32> to vector<1x8x32xf32>
    %51 = vector.shape_cast %43 : vector<8x32xf32> to vector<1x8x32xf32>
    %52 = vector.shape_cast %44 : vector<8x32xf32> to vector<1x8x32xf32>
    %53 = vector.shape_cast %45 : vector<8x32xf32> to vector<1x8x32xf32>
    %54 = tpu.concatenate %46, %47, %48, %49, %50, %51, %52, %53 in 0 : vector<1x8x32xf32>, vector<1x8x32xf32>, vector<1x8x32xf32>, vector<1x8x32xf32>, vector<1x8x32xf32>, vector<1x8x32xf32>, vector<1x8x32xf32>, vector<1x8x32xf32> -> vector<8x8x32xf32>
    %55 = vector.extract_strided_slice %20 {offsets = [0, 0], sizes = [8, 32], strides = [1, 1]} : vector<16x128xf32> to vector<8x32xf32>
    %56 = vector.extract_strided_slice %20 {offsets = [0, 32], sizes = [8, 32], strides = [1, 1]} : vector<16x128xf32> to vector<8x32xf32>
    %57 = vector.extract_strided_slice %20 {offsets = [0, 64], sizes = [8, 32], strides = [1, 1]} : vector<16x128xf32> to vector<8x32xf32>
    %58 = vector.extract_strided_slice %20 {offsets = [0, 96], sizes = [8, 32], strides = [1, 1]} : vector<16x128xf32> to vector<8x32xf32>
    %59 = vector.extract_strided_slice %20 {offsets = [8, 0], sizes = [8, 32], strides = [1, 1]} : vector<16x128xf32> to vector<8x32xf32>
    %60 = vector.extract_strided_slice %20 {offsets = [8, 32], sizes = [8, 32], strides = [1, 1]} : vector<16x128xf32> to vector<8x32xf32>
    %61 = vector.extract_strided_slice %20 {offsets = [8, 64], sizes = [8, 32], strides = [1, 1]} : vector<16x128xf32> to vector<8x32xf32>
    %62 = vector.extract_strided_slice %20 {offsets = [8, 96], sizes = [8, 32], strides = [1, 1]} : vector<16x128xf32> to vector<8x32xf32>
    %63 = vector.shape_cast %55 : vector<8x32xf32> to vector<1x8x32xf32>
    %64 = vector.shape_cast %56 : vector<8x32xf32> to vector<1x8x32xf32>
    %65 = vector.shape_cast %57 : vector<8x32xf32> to vector<1x8x32xf32>
    %66 = vector.shape_cast %58 : vector<8x32xf32> to vector<1x8x32xf32>
    %67 = vector.shape_cast %59 : vector<8x32xf32> to vector<1x8x32xf32>
    %68 = vector.shape_cast %60 : vector<8x32xf32> to vector<1x8x32xf32>
    %69 = vector.shape_cast %61 : vector<8x32xf32> to vector<1x8x32xf32>
    %70 = vector.shape_cast %62 : vector<8x32xf32> to vector<1x8x32xf32>
    %71 = tpu.concatenate %63, %64, %65, %66, %67, %68, %69, %70 in 0 : vector<1x8x32xf32>, vector<1x8x32xf32>, vector<1x8x32xf32>, vector<1x8x32xf32>, vector<1x8x32xf32>, vector<1x8x32xf32>, vector<1x8x32xf32>, vector<1x8x32xf32> -> vector<8x8x32xf32>
    %c0_14 = arith.constant 0 : index
    %c0_15 = arith.constant 0 : index
    %72 = vector.load %arg7[%c0_14, %c0_15] : memref<8x32xf32, #tpu.memory_space<vmem>>, vector<8x32xf32>
    %c0_16 = arith.constant 0 : index
    %c0_17 = arith.constant 0 : index
    %73 = vector.load %arg8[%c0_16, %c0_17] : memref<8x32xf32, #tpu.memory_space<vmem>>, vector<8x32xf32>
    %74 = vector.extract_strided_slice %37 {offsets = [0, 0, 16], sizes = [8, 8, 16], strides = [1, 1, 1]} : vector<8x8x32xf32> to vector<8x8x16xf32>
    %75 = vector.extract_strided_slice %37 {offsets = [0, 0, 0], sizes = [8, 8, 16], strides = [1, 1, 1]} : vector<8x8x32xf32> to vector<8x8x16xf32>
    %76 = tpu.concatenate %74, %75 in 2 : vector<8x8x16xf32>, vector<8x8x16xf32> -> vector<8x8x32xf32>
    %77 = vector.shape_cast %72 : vector<8x32xf32> to vector<1x8x32xf32>
    %78 = vector.broadcast %77 : vector<1x8x32xf32> to vector<8x8x32xf32>
    %79 = arith.mulf %37, %78 : vector<8x8x32xf32>
    %80 = vector.shape_cast %73 : vector<8x32xf32> to vector<1x8x32xf32>
    %81 = vector.broadcast %80 : vector<1x8x32xf32> to vector<8x8x32xf32>
    %82 = arith.mulf %76, %81 : vector<8x8x32xf32>
    %83 = arith.addf %79, %82 : vector<8x8x32xf32>
    %84 = vector.extract_strided_slice %54 {offsets = [0, 0, 16], sizes = [8, 8, 16], strides = [1, 1, 1]} : vector<8x8x32xf32> to vector<8x8x16xf32>
    %85 = vector.extract_strided_slice %54 {offsets = [0, 0, 0], sizes = [8, 8, 16], strides = [1, 1, 1]} : vector<8x8x32xf32> to vector<8x8x16xf32>
    %86 = tpu.concatenate %84, %85 in 2 : vector<8x8x16xf32>, vector<8x8x16xf32> -> vector<8x8x32xf32>
    %87 = vector.shape_cast %72 : vector<8x32xf32> to vector<1x8x32xf32>
    %88 = vector.broadcast %87 : vector<1x8x32xf32> to vector<8x8x32xf32>
    %89 = arith.mulf %54, %88 : vector<8x8x32xf32>
    %90 = vector.shape_cast %73 : vector<8x32xf32> to vector<1x8x32xf32>
    %91 = vector.broadcast %90 : vector<1x8x32xf32> to vector<8x8x32xf32>
    %92 = arith.mulf %86, %91 : vector<8x8x32xf32>
    %93 = arith.addf %89, %92 : vector<8x8x32xf32>
    %94 = arith.truncf %83 : vector<8x8x32xf32> to vector<8x8x32xbf16>
    %95 = arith.truncf %93 : vector<8x8x32xf32> to vector<8x8x32xbf16>
    "tpu.trace_start"() <{level = 10 : i32, message = "gtd,gsd->gts"}> : () -> ()
    %cst_18 = arith.constant dense<0.000000e+00> : vector<8x8x8xf32>
    %96 = tpu.matmul %94, %95, %cst_18 {dimension_numbers = #tpu.dot_dimension_numbers<[2], [2], [1], [1], [0, 0, 0, 1, 1, 1], [0], [0]>} : vector<8x8x32xbf16>, vector<8x8x32xbf16>, vector<8x8x8xf32> -> vector<8x8x8xf32>
    "tpu.trace_stop"() : () -> ()
    %97 = tpu.iota {dimensions = array<i32: 1>} : vector<1x8x8xi32>
    %98 = tpu.iota {dimensions = array<i32: 2>} : vector<1x8x8xi32>
    %99 = arith.cmpi sgt, %98, %97 : vector<1x8x8xi32>
    %cst_19 = arith.constant 0xFF800000 : f32
    %100 = vector.shape_cast %99 : vector<1x8x8xi1> to vector<1x8x8xi1>
    %101 = vector.broadcast %100 : vector<1x8x8xi1> to vector<8x8x8xi1>
    %102 = vector.broadcast %cst_19 : f32 to vector<8x8x8xf32>
    %103 = arith.select %101, %102, %96 : vector<8x8x8xi1>, vector<8x8x8xf32>
    %cst_20 = arith.constant dense<0xFF800000> : vector<8x8xf32>
    %104 = vector.multi_reduction <maximumf>, %103, %cst_20 [2] : vector<8x8x8xf32> to vector<8x8xf32>
    %105 = vector.shape_cast %104 : vector<8x8xf32> to vector<8x8x1xf32>
    %106 = vector.broadcast %105 : vector<8x8x1xf32> to vector<8x8x8xf32>
    %107 = arith.subf %103, %106 : vector<8x8x8xf32>
    %108 = math.exp %107 : vector<8x8x8xf32>
    %cst_21 = arith.constant dense<0.000000e+00> : vector<8x8xf32>
    %109 = vector.multi_reduction <add>, %108, %cst_21 [2] : vector<8x8x8xf32> to vector<8x8xf32>
    %110 = vector.shape_cast %109 : vector<8x8xf32> to vector<8x8x1xf32>
    %111 = arith.truncf %108 : vector<8x8x8xf32> to vector<8x8x8xbf16>
    %112 = arith.truncf %71 : vector<8x8x32xf32> to vector<8x8x32xbf16>
    "tpu.trace_start"() <{level = 10 : i32, message = "gts,gsd->gtd"}> : () -> ()
    %cst_22 = arith.constant dense<0.000000e+00> : vector<8x8x32xf32>
    %113 = tpu.matmul %111, %112, %cst_22 {dimension_numbers = #tpu.dot_dimension_numbers<[2], [1], [1], [2], [0, 0, 0, 1, 1, 2], [0], [0]>} : vector<8x8x8xbf16>, vector<8x8x32xbf16>, vector<8x8x32xf32> -> vector<8x8x32xf32>
    "tpu.trace_stop"() : () -> ()
    %114 = tpu.reciprocal %110 {approx = true} : vector<8x8x1xf32> -> vector<8x8x1xf32>
    %115 = vector.broadcast %114 : vector<8x8x1xf32> to vector<8x8x32xf32>
    %116 = arith.mulf %113, %115 : vector<8x8x32xf32>
    %117 = vector.extract_strided_slice %116 {offsets = [0, 0, 0], sizes = [1, 8, 32], strides = [1, 1, 1]} : vector<8x8x32xf32> to vector<1x8x32xf32>
    %118 = vector.shape_cast %117 : vector<1x8x32xf32> to vector<8x32xf32>
    %119 = vector.extract_strided_slice %116 {offsets = [1, 0, 0], sizes = [1, 8, 32], strides = [1, 1, 1]} : vector<8x8x32xf32> to vector<1x8x32xf32>
    %120 = vector.shape_cast %119 : vector<1x8x32xf32> to vector<8x32xf32>
    %121 = vector.extract_strided_slice %116 {offsets = [2, 0, 0], sizes = [1, 8, 32], strides = [1, 1, 1]} : vector<8x8x32xf32> to vector<1x8x32xf32>
    %122 = vector.shape_cast %121 : vector<1x8x32xf32> to vector<8x32xf32>
    %123 = vector.extract_strided_slice %116 {offsets = [3, 0, 0], sizes = [1, 8, 32], strides = [1, 1, 1]} : vector<8x8x32xf32> to vector<1x8x32xf32>
    %124 = vector.shape_cast %123 : vector<1x8x32xf32> to vector<8x32xf32>
    %125 = tpu.concatenate %118, %120, %122, %124 in 1 : vector<8x32xf32>, vector<8x32xf32>, vector<8x32xf32>, vector<8x32xf32> -> vector<8x128xf32>
    %126 = vector.extract_strided_slice %116 {offsets = [4, 0, 0], sizes = [1, 8, 32], strides = [1, 1, 1]} : vector<8x8x32xf32> to vector<1x8x32xf32>
    %127 = vector.shape_cast %126 : vector<1x8x32xf32> to vector<8x32xf32>
    %128 = vector.extract_strided_slice %116 {offsets = [5, 0, 0], sizes = [1, 8, 32], strides = [1, 1, 1]} : vector<8x8x32xf32> to vector<1x8x32xf32>
    %129 = vector.shape_cast %128 : vector<1x8x32xf32> to vector<8x32xf32>
    %130 = vector.extract_strided_slice %116 {offsets = [6, 0, 0], sizes = [1, 8, 32], strides = [1, 1, 1]} : vector<8x8x32xf32> to vector<1x8x32xf32>
    %131 = vector.shape_cast %130 : vector<1x8x32xf32> to vector<8x32xf32>
    %132 = vector.extract_strided_slice %116 {offsets = [7, 0, 0], sizes = [1, 8, 32], strides = [1, 1, 1]} : vector<8x8x32xf32> to vector<1x8x32xf32>
    %133 = vector.shape_cast %132 : vector<1x8x32xf32> to vector<8x32xf32>
    %134 = tpu.concatenate %127, %129, %131, %133 in 1 : vector<8x32xf32>, vector<8x32xf32>, vector<8x32xf32>, vector<8x32xf32> -> vector<8x128xf32>
    %135 = tpu.concatenate %125, %134 in 0 : vector<8x128xf32>, vector<8x128xf32> -> vector<16x128xf32>
    %136 = arith.truncf %135 : vector<16x128xf32> to vector<16x128xbf16>
    %c0_23 = arith.constant 0 : index
    %c0_24 = arith.constant 0 : index
    %137 = vector.load %arg6[%c0_23, %c0_24] : memref<128x128xbf16, #tpu.memory_space<vmem>>, vector<128x128xbf16>
    %cst_25 = arith.constant dense<0.000000e+00> : vector<16x128xf32>
    %138 = tpu.matmul %136, %137, %cst_25 {dimension_numbers = #tpu.dot_dimension_numbers<[1], [0], [0], [1], [0, 0, 1, 1], [], []>} : vector<16x128xbf16>, vector<128x128xbf16>, vector<16x128xf32> -> vector<16x128xf32>
    %139 = arith.addf %138, %0 : vector<16x128xf32>
    %140 = arith.mulf %139, %139 : vector<16x128xf32>
    %cst_26 = arith.constant dense<0.000000e+00> : vector<16xf32>
    %141 = vector.multi_reduction <add>, %140, %cst_26 [1] : vector<16x128xf32> to vector<16xf32>
    %142 = vector.shape_cast %141 : vector<16xf32> to vector<16x1xf32>
    %cst_27 = arith.constant 1.280000e+02 : f32
    %143 = vector.broadcast %cst_27 : f32 to vector<16x1xf32>
    %144 = arith.divf %142, %143 : vector<16x1xf32>
    %cst_28 = arith.constant 9.99999974E-6 : f32
    %145 = vector.broadcast %cst_28 : f32 to vector<16x1xf32>
    %146 = arith.addf %144, %145 : vector<16x1xf32>
    %147 = math.rsqrt %146 : vector<16x1xf32>
    %148 = vector.broadcast %147 : vector<16x1xf32> to vector<16x128xf32>
    %149 = arith.mulf %139, %148 : vector<16x128xf32>
    %c0_29 = arith.constant 0 : index
    %c0_30 = arith.constant 0 : index
    %150 = vector.load %arg9[%c0_29, %c0_30] : memref<1x128xf32, #tpu.memory_space<vmem>>, vector<1x128xf32>
    %151 = vector.broadcast %150 : vector<1x128xf32> to vector<16x128xf32>
    %152 = arith.mulf %149, %151 : vector<16x128xf32>
    %153 = arith.truncf %152 : vector<16x128xf32> to vector<16x128xbf16>
    %c0_31 = arith.constant 0 : index
    %c0_32 = arith.constant 0 : index
    %154 = vector.load %arg10[%c0_31, %c0_32] : memref<128x256xbf16, #tpu.memory_space<vmem>>, vector<128x256xbf16>
    %cst_33 = arith.constant dense<0.000000e+00> : vector<16x256xf32>
    %155 = tpu.matmul %153, %154, %cst_33 {dimension_numbers = #tpu.dot_dimension_numbers<[1], [0], [0], [1], [0, 0, 1, 1], [], []>} : vector<16x128xbf16>, vector<128x256xbf16>, vector<16x256xf32> -> vector<16x256xf32>
    %c0_34 = arith.constant 0 : index
    %c0_35 = arith.constant 0 : index
    %156 = vector.load %arg11[%c0_34, %c0_35] : memref<128x256xbf16, #tpu.memory_space<vmem>>, vector<128x256xbf16>
    %cst_36 = arith.constant dense<0.000000e+00> : vector<16x256xf32>
    %157 = tpu.matmul %153, %156, %cst_36 {dimension_numbers = #tpu.dot_dimension_numbers<[1], [0], [0], [1], [0, 0, 1, 1], [], []>} : vector<16x128xbf16>, vector<128x256xbf16>, vector<16x256xf32> -> vector<16x256xf32>
    %158 = arith.negf %155 : vector<16x256xf32>
    %159 = math.exp %158 : vector<16x256xf32>
    %cst_37 = arith.constant 1.000000e+00 : f32
    %160 = vector.broadcast %cst_37 : f32 to vector<16x256xf32>
    %161 = arith.addf %160, %159 : vector<16x256xf32>
    %162 = arith.divf %160, %161 : vector<16x256xf32>
    %163 = arith.mulf %155, %162 : vector<16x256xf32>
    %164 = arith.mulf %163, %157 : vector<16x256xf32>
    %165 = arith.truncf %164 : vector<16x256xf32> to vector<16x256xbf16>
    %c0_38 = arith.constant 0 : index
    %c0_39 = arith.constant 0 : index
    %166 = vector.load %arg12[%c0_38, %c0_39] : memref<256x128xbf16, #tpu.memory_space<vmem>>, vector<256x128xbf16>
    %cst_40 = arith.constant dense<0.000000e+00> : vector<16x128xf32>
    %167 = tpu.matmul %165, %166, %cst_40 {dimension_numbers = #tpu.dot_dimension_numbers<[1], [0], [0], [1], [0, 0, 1, 1], [], []>} : vector<16x256xbf16>, vector<256x128xbf16>, vector<16x128xf32> -> vector<16x128xf32>
    %168 = arith.addf %167, %139 : vector<16x128xf32>
    %c0_41 = arith.constant 0 : index
    %c0_42 = arith.constant 0 : index
    %169 = vector.load %arg13[%c0_41, %c0_42] : memref<16x128xf32, #tpu.memory_space<vmem>>, vector<16x128xf32>
    tpu.vector_store %arg13[%c0_41, %c0_42], %168 {strides = array<i32>} : memref<16x128xf32, #tpu.memory_space<vmem>>, vector<16x128xf32>,
    return
  }
  func.func @transform_0(%arg0: i32) -> (i32, i32) {
    %c0_i32 = arith.constant 0 : i32
    %c0_i32_0 = arith.constant 0 : i32
    %c0_i32_1 = arith.constant 0 : i32
    return %c0_i32, %c0_i32_0 : i32, i32
  }
  func.func @transform_1(%arg0: i32) -> (i32, i32) {
    %c0_i32 = arith.constant 0 : i32
    %c0_i32_0 = arith.constant 0 : i32
    %c0_i32_1 = arith.constant 0 : i32
    return %c0_i32, %c0_i32_0 : i32, i32
  }
  func.func @transform_2(%arg0: i32) -> (i32, i32) {
    %c0_i32 = arith.constant 0 : i32
    %c0_i32_0 = arith.constant 0 : i32
    %c0_i32_1 = arith.constant 0 : i32
    return %c0_i32, %c0_i32_0 : i32, i32
  }
  func.func @transform_3(%arg0: i32) -> (i32, i32) {
    %c0_i32 = arith.constant 0 : i32
    %c0_i32_0 = arith.constant 0 : i32
    %c0_i32_1 = arith.constant 0 : i32
    return %c0_i32, %c0_i32_0 : i32, i32
  }
  func.func @transform_4(%arg0: i32) -> (i32, i32) {
    %c0_i32 = arith.constant 0 : i32
    %c0_i32_0 = arith.constant 0 : i32
    %c0_i32_1 = arith.constant 0 : i32
    return %c0_i32, %c0_i32_0 : i32, i32
  }
  func.func @transform_5(%arg0: i32) -> (i32, i32) {
    %c0_i32 = arith.constant 0 : i32
    %c0_i32_0 = arith.constant 0 : i32
    %c0_i32_1 = arith.constant 0 : i32
    return %c0_i32, %c0_i32_0 : i32, i32
  }
  func.func @transform_6(%arg0: i32) -> (i32, i32) {
    %c0_i32 = arith.constant 0 : i32
    %c0_i32_0 = arith.constant 0 : i32
    %c0_i32_1 = arith.constant 0 : i32
    return %c0_i32, %c0_i32_0 : i32, i32
  }
  func.func @transform_7(%arg0: i32) -> (i32, i32) {
    %c0_i32 = arith.constant 0 : i32
    %c0_i32_0 = arith.constant 0 : i32
    %c0_i32_1 = arith.constant 0 : i32
    return %c0_i32, %c0_i32_0 : i32, i32
  }
  func.func @transform_8(%arg0: i32) -> (i32, i32) {
    %c0_i32 = arith.constant 0 : i32
    %c0_i32_0 = arith.constant 0 : i32
    %c0_i32_1 = arith.constant 0 : i32
    return %c0_i32, %c0_i32_0 : i32, i32
  }
  func.func @transform_9(%arg0: i32) -> (i32, i32) {
    %c0_i32 = arith.constant 0 : i32
    %c0_i32_0 = arith.constant 0 : i32
    %c0_i32_1 = arith.constant 0 : i32
    return %c0_i32, %c0_i32_0 : i32, i32
  }
  func.func @transform_10(%arg0: i32) -> (i32, i32) {
    %c0_i32 = arith.constant 0 : i32
    %c0_i32_0 = arith.constant 0 : i32
    %c0_i32_1 = arith.constant 0 : i32
    return %c0_i32, %c0_i32_0 : i32, i32
  }
  func.func @transform_11(%arg0: i32) -> (i32, i32) {
    %c0_i32 = arith.constant 0 : i32
    %c0_i32_0 = arith.constant 0 : i32
    %c0_i32_1 = arith.constant 0 : i32
    return %c0_i32, %c0_i32_0 : i32, i32
  }
  func.func @transform_12(%arg0: i32) -> (i32, i32) {
    %c0_i32 = arith.constant 0 : i32
    %c0_i32_0 = arith.constant 0 : i32
    %c0_i32_1 = arith.constant 0 : i32
    return %c0_i32, %c0_i32_0 : i32, i32
  }
}

</mosaic_0001>

<llo_original>
// kernel: tpu_custom_call.1
$region0: #{tpu_custom_call.1}
  #allocation0 [shape = 'u32[]', space=smem, size = 0x4, offset = 0x4, fixed_abs, tag = 'smem constant byte address 0x4 - core index']
  #allocation1 [shape = 'u32[72,128]{1,0:T(1,128)}', space=vmem, size = 0x9000, scoped, tag = 'internal scratch']
  %s0 = inlined_call_operand.hbm [shape: f32[16,128], index: 0, kind: input, shape index: {}]
  %s1 = inlined_call_operand.hbm [shape: f32[1,128], index: 1, kind: input, shape index: {}]
  %s2 = inlined_call_operand.hbm [shape: bf16[128,128], index: 2, kind: input, shape index: {}]
  %s3 = inlined_call_operand.hbm [shape: bf16[128,128], index: 3, kind: input, shape index: {}]
  %s4 = inlined_call_operand.hbm [shape: bf16[128,128], index: 4, kind: input, shape index: {}]
  %s5 = inlined_call_operand.hbm [shape: bf16[128,128], index: 5, kind: input, shape index: {}]
  %s6 = inlined_call_operand.hbm [shape: f32[8,32], index: 6, kind: input, shape index: {}]
  %s7 = inlined_call_operand.hbm [shape: f32[8,32], index: 7, kind: input, shape index: {}]
  %s8 = inlined_call_operand.vmem [shape: f32[1,128], index: 8, kind: input, shape index: {}]
  %s9 = inlined_call_operand.hbm [shape: bf16[128,256], index: 9, kind: input, shape index: {}]
  %s10 = inlined_call_operand.hbm [shape: bf16[128,256], index: 10, kind: input, shape index: {}]
  %s11 = inlined_call_operand.hbm [shape: bf16[256,128], index: 11, kind: input, shape index: {}]
  %s12 = inlined_call_operand.hbm [shape: f32[16,128], index: 12, kind: output, shape index: {}]
  %s13 = sld [smem:[#allocation0]]
  $region102: #{tpu_custom_call.1} parent=0
    _
  %s15 = ssub.s32 1, %s13
  %s16 = scalar_select 0, %s15, %s13
  $region1: #{tpu_custom_call.1} parent=0
    #allocation2 [shape = 'u8[8192]{0}', space=vmem, size = 0x2000, scoped, tag = 'input window, operand 0, single buffered']
    #allocation3 [shape = 's32[1]{0}', space=sflag, size = 0x4, scoped, tag = 'scoped memory for tpu_custom_call.1']
    #allocation4 [shape = 's32[1]{0}', space=sflag, size = 0x4, scoped, tag = 'scoped memory for tpu_custom_call.1']
    #allocation5 [shape = 'u8[512]{0}', space=vmem, size = 0x400, scoped, tag = 'input window, operand 1, single buffered']
    #allocation6 [shape = 's32[1]{0}', space=sflag, size = 0x4, scoped, tag = 'scoped memory for tpu_custom_call.1']
    #allocation7 [shape = 'u8[32768]{0}', space=vmem, size = 0x8000, scoped, tag = 'input window, operand 2, single buffered']
    #allocation8 [shape = 'u8[32768]{0}', space=vmem, size = 0x8000, scoped, tag = 'input window, operand 3, single buffered']
    #allocation9 [shape = 's32[1]{0}', space=sflag, size = 0x4, scoped, tag = 'scoped memory for tpu_custom_call.1']
    #allocation10 [shape = 'u8[32768]{0}', space=vmem, size = 0x8000, scoped, tag = 'input window, operand 4, single buffered']
    #allocation11 [shape = 'u8[32768]{0}', space=vmem, size = 0x8000, scoped, tag = 'input window, operand 5, single buffered']
    #allocation12 [shape = 's32[1]{0}', space=sflag, size = 0x4, scoped, tag = 'scoped memory for tpu_custom_call.1']
    #allocation13 [shape = 'u8[4096]{0}', space=vmem, size = 0x1000, scoped, tag = 'input window, operand 6, single buffered']
    #allocation14 [shape = 'u8[4096]{0}', space=vmem, size = 0x1000, scoped, tag = 'input window, operand 7, single buffered']
    #allocation15 [shape = 's32[1]{0}', space=sflag, size = 0x4, scoped, tag = 'scoped memory for tpu_custom_call.1']
    #allocation16 [shape = 'u8[65536]{0}', space=vmem, size = 0x10000, scoped, tag = 'input window, operand 9, single buffered']
    #allocation17 [shape = 'u8[65536]{0}', space=vmem, size = 0x10000, scoped, tag = 'input window, operand 10, single buffered']
    #allocation18 [shape = 's32[1]{0}', space=sflag, size = 0x4, scoped, tag = 'scoped memory for tpu_custom_call.1']
    #allocation19 [shape = 'u8[65536]{0}', space=vmem, size = 0x10000, scoped, tag = 'input window, operand 11, single buffered']
    #allocation20 [shape = 'u8[8192]{0}', space=vmem, size = 0x2000, scoped, tag = 'output window, operand 0, single buffered']
    %17 = vsyncpa [#allocation3], 0
    %18 = vsyncpa [#allocation6], 0
    %19 = vsyncpa [#allocation9], 0
    %20 = vsyncpa [#allocation12], 0
    %21 = vsyncpa [#allocation15], 0
    %22 = vsyncpa [#allocation18], 0
    %23 = vsyncpa [#allocation4], 0
    // Predicated region
    $region2: #{tpu_custom_call.1} parent=1 // pred_check
      _
    $region3: #{tpu_custom_call.1} parent=1 // pred_check_branch
      %25 = sbr.rel (0) target = $region5
    $region4: #{tpu_custom_call.1} parent=1 // pred_region
      %27 = vsyncadd [#allocation3], 0
      %s28 = sshll.u32 %s0, 4
      %s29 = int_to_ptr.hbm [resolvable:$true] %s28
      %s30 = sshll.u32 [#allocation2], 4
      %s31 = int_to_ptr.vmem [resolvable:$true] %s30
      %36 = dma.hbm_to_vmem [thread:$0]  %s29, 256, %s31, [#allocation3], 128, 128, 8
    $region5: #{tpu_custom_call.1} parent=1 // pred_fallthru
      _
    // Predicated region
    $region6: #{tpu_custom_call.1} parent=1 // pred_check
      _
    $region7: #{tpu_custom_call.1} parent=1 // pred_check_branch
      %38 = sbr.rel (0) target = $region9
    $region8: #{tpu_custom_call.1} parent=1 // pred_region
      %40 = vsyncadd [#allocation6], 0
      %s42 = sshll.u32 %s1, 4
      %s43 = int_to_ptr.hbm [resolvable:$true] %s42
      %s44 = sshll.u32 [#allocation5], 4
      %s45 = int_to_ptr.vmem [resolvable:$true] %s44
      %47 = dma.hbm_to_vmem [thread:$0]  %s43, 16, %s45, [#allocation6]
    $region9: #{tpu_custom_call.1} parent=1 // pred_fallthru
      _
    // Predicated region
    $region10: #{tpu_custom_call.1} parent=1 // pred_check
      _
    $region11: #{tpu_custom_call.1} parent=1 // pred_check_branch
      %49 = sbr.rel (0) target = $region13
    $region12: #{tpu_custom_call.1} parent=1 // pred_region
      %51 = vsyncadd [#allocation6], 0
      %s52 = sshll.u32 %s2, 4
      %s53 = int_to_ptr.hbm [resolvable:$true] %s52
      %s54 = sshll.u32 [#allocation7], 4
      %s55 = int_to_ptr.vmem [resolvable:$true] %s54
      %60 = dma.hbm_to_vmem [thread:$0]  %s53, 1024, %s55, [#allocation6], 64, 64, 4
    $region13: #{tpu_custom_call.1} parent=1 // pred_fallthru
      _
    // Predicated region
    $region14: #{tpu_custom_call.1} parent=1 // pred_check
      _
    $region15: #{tpu_custom_call.1} parent=1 // pred_check_branch
      %62 = sbr.rel (0) target = $region17
    $region16: #{tpu_custom_call.1} parent=1 // pred_region
      %64 = vsyncadd [#allocation9], 0
      %s65 = sshll.u32 %s3, 4
      %s66 = int_to_ptr.hbm [resolvable:$true] %s65
      %s67 = sshll.u32 [#allocation8], 4
      %s68 = int_to_ptr.vmem [resolvable:$true] %s67
      %73 = dma.hbm_to_vmem [thread:$0]  %s66, 1024, %s68, [#allocation9], 64, 64, 4
    $region17: #{tpu_custom_call.1} parent=1 // pred_fallthru
      _
    // Predicated region
    $region18: #{tpu_custom_call.1} parent=1 // pred_check
      _
    $region19: #{tpu_custom_call.1} parent=1 // pred_check_branch
      %75 = sbr.rel (0) target = $region21
    $region20: #{tpu_custom_call.1} parent=1 // pred_region
      %77 = vsyncadd [#allocation9], 0
      %s78 = sshll.u32 %s4, 4
      %s79 = int_to_ptr.hbm [resolvable:$true] %s78
      %s80 = sshll.u32 [#allocation10], 4
      %s81 = int_to_ptr.vmem [resolvable:$true] %s80
      %86 = dma.hbm_to_vmem [thread:$0]  %s79, 1024, %s81, [#allocation9], 64, 64, 4
    $region21: #{tpu_custom_call.1} parent=1 // pred_fallthru
      _
    // Predicated region
    $region22: #{tpu_custom_call.1} parent=1 // pred_check
      _
    $region23: #{tpu_custom_call.1} parent=1 // pred_check_branch
      %88 = sbr.rel (0) target = $region25
    $region24: #{tpu_custom_call.1} parent=1 // pred_region
      %90 = vsyncadd [#allocation12], 0
      %s91 = sshll.u32 %s5, 4
      %s92 = int_to_ptr.hbm [resolvable:$true] %s91
      %s93 = sshll.u32 [#allocation11], 4
      %s94 = int_to_ptr.vmem [resolvable:$true] %s93
      %99 = dma.hbm_to_vmem [thread:$0]  %s92, 1024, %s94, [#allocation12], 64, 64, 4
    $region25: #{tpu_custom_call.1} parent=1 // pred_fallthru
      _
    // Predicated region
    $region26: #{tpu_custom_call.1} parent=1 // pred_check
      _
    $region27: #{tpu_custom_call.1} parent=1 // pred_check_branch
      %101 = sbr.rel (0) target = $region29
    $region28: #{tpu_custom_call.1} parent=1 // pred_region
      %103 = vsyncadd [#allocation12], 0
      %s105 = sshll.u32 %s6, 4
      %s106 = int_to_ptr.hbm [resolvable:$true] %s105
      %s107 = sshll.u32 [#allocation13], 4
      %s108 = int_to_ptr.vmem [resolvable:$true] %s107
      %110 = dma.hbm_to_vmem [thread:$0]  %s106, 128, %s108, [#allocation12]
    $region29: #{tpu_custom_call.1} parent=1 // pred_fallthru
      _
    // Predicated region
    $region30: #{tpu_custom_call.1} parent=1 // pred_check
      _
    $region31: #{tpu_custom_call.1} parent=1 // pred_check_branch
      %112 = sbr.rel (0) target = $region33
    $region32: #{tpu_custom_call.1} parent=1 // pred_region
      %114 = vsyncadd [#allocation15], 0
      %s116 = sshll.u32 %s7, 4
      %s117 = int_to_ptr.hbm [resolvable:$true] %s116
      %s118 = sshll.u32 [#allocation14], 4
      %s119 = int_to_ptr.vmem [resolvable:$true] %s118
      %121 = dma.hbm_to_vmem [thread:$0]  %s117, 128, %s119, [#allocation15]
    $region33: #{tpu_custom_call.1} parent=1 // pred_fallthru
      _
    // Predicated region
    $region34: #{tpu_custom_call.1} parent=1 // pred_check
      _
    $region35: #{tpu_custom_call.1} parent=1 // pred_check_branch
      %123 = sbr.rel (0) target = $region37
    $region36: #{tpu_custom_call.1} parent=1 // pred_region
      _
    $region37: #{tpu_custom_call.1} parent=1 // pred_fallthru
      _
    // Predicated region
    $region38: #{tpu_custom_call.1} parent=1 // pred_check
      _
    $region39: #{tpu_custom_call.1} parent=1 // pred_check_branch
      %125 = sbr.rel (0) target = $region41
    $region40: #{tpu_custom_call.1} parent=1 // pred_region
      %127 = vsyncadd [#allocation15], 0
      %s128 = sshll.u32 %s9, 4
      %s129 = int_to_ptr.hbm [resolvable:$true] %s128
      %s130 = sshll.u32 [#allocation16], 4
      %s131 = int_to_ptr.vmem [resolvable:$true] %s130
      %136 = dma.hbm_to_vmem [thread:$0]  %s129, 2048, %s131, [#allocation15], 128, 128, 8
    $region41: #{tpu_custom_call.1} parent=1 // pred_fallthru
      _
    // Predicated region
    $region42: #{tpu_custom_call.1} parent=1 // pred_check
      _
    $region43: #{tpu_custom_call.1} parent=1 // pred_check_branch
      %138 = sbr.rel (0) target = $region45
    $region44: #{tpu_custom_call.1} parent=1 // pred_region
      %140 = vsyncadd [#allocation18], 0
      %s141 = sshll.u32 %s10, 4
      %s142 = int_to_ptr.hbm [resolvable:$true] %s141
      %s143 = sshll.u32 [#allocation17], 4
      %s144 = int_to_ptr.vmem [resolvable:$true] %s143
      %149 = dma.hbm_to_vmem [thread:$0]  %s142, 2048, %s144, [#allocation18], 128, 128, 8
    $region45: #{tpu_custom_call.1} parent=1 // pred_fallthru
      _
    // Predicated region
    $region46: #{tpu_custom_call.1} parent=1 // pred_check
      _
    $region47: #{tpu_custom_call.1} parent=1 // pred_check_branch
      %151 = sbr.rel (0) target = $region49
    $region48: #{tpu_custom_call.1} parent=1 // pred_region
      %153 = vsyncadd [#allocation18], 0
      %s154 = sshll.u32 %s11, 4
      %s155 = int_to_ptr.hbm [resolvable:$true] %s154
      %s156 = sshll.u32 [#allocation19], 4
      %s157 = int_to_ptr.vmem [resolvable:$true] %s156
      %162 = dma.hbm_to_vmem [thread:$0]  %s155, 2048, %s157, [#allocation18], 64, 64, 4
    $region49: #{tpu_custom_call.1} parent=1 // pred_fallthru
      _
    // Predicated region
    $region50: #{tpu_custom_call.1} parent=1 // pred_check
      _
    $region51: #{tpu_custom_call.1} parent=1 // pred_check_branch
      %164 = sbr.rel (0) target = $region53
    $region52: #{tpu_custom_call.1} parent=1 // pred_region
      %166 = dma.done [#allocation3], 256
    $region53: #{tpu_custom_call.1} parent=1 // pred_fallthru
      _
    // Predicated region
    $region54: #{tpu_custom_call.1} parent=1 // pred_check
      _
    $region55: #{tpu_custom_call.1} parent=1 // pred_check_branch
      %168 = sbr.rel (0) target = $region57
    $region56: #{tpu_custom_call.1} parent=1 // pred_region
      %170 = dma.done [#allocation6], 16
    $region57: #{tpu_custom_call.1} parent=1 // pred_fallthru
      _
    // Predicated region
    $region58: #{tpu_custom_call.1} parent=1 // pred_check
      _
    $region59: #{tpu_custom_call.1} parent=1 // pred_check_branch
      %172 = sbr.rel (0) target = $region61
    $region60: #{tpu_custom_call.1} parent=1 // pred_region
      %174 = dma.done [#allocation6], 1024
    $region61: #{tpu_custom_call.1} parent=1 // pred_fallthru
      _
    // Predicated region
    $region62: #{tpu_custom_call.1} parent=1 // pred_check
      _
    $region63: #{tpu_custom_call.1} parent=1 // pred_check_branch
      %176 = sbr.rel (0) target = $region65
    $region64: #{tpu_custom_call.1} parent=1 // pred_region
      %178 = dma.done [#allocation9], 1024
    $region65: #{tpu_custom_call.1} parent=1 // pred_fallthru
      _
    // Predicated region
    $region66: #{tpu_custom_call.1} parent=1 // pred_check
      _
    $region67: #{tpu_custom_call.1} parent=1 // pred_check_branch
      %180 = sbr.rel (0) target = $region69
    $region68: #{tpu_custom_call.1} parent=1 // pred_region
      %182 = dma.done [#allocation9], 1024
    $region69: #{tpu_custom_call.1} parent=1 // pred_fallthru
      _
    // Predicated region
    $region70: #{tpu_custom_call.1} parent=1 // pred_check
      _
    $region71: #{tpu_custom_call.1} parent=1 // pred_check_branch
      %184 = sbr.rel (0) target = $region73
    $region72: #{tpu_custom_call.1} parent=1 // pred_region
      %186 = dma.done [#allocation12], 1024
    $region73: #{tpu_custom_call.1} parent=1 // pred_fallthru
      _
    // Predicated region
    $region74: #{tpu_custom_call.1} parent=1 // pred_check
      _
    $region75: #{tpu_custom_call.1} parent=1 // pred_check_branch
      %188 = sbr.rel (0) target = $region77
    $region76: #{tpu_custom_call.1} parent=1 // pred_region
      %190 = dma.done [#allocation12], 128
    $region77: #{tpu_custom_call.1} parent=1 // pred_fallthru
      _
    // Predicated region
    $region78: #{tpu_custom_call.1} parent=1 // pred_check
      _
    $region79: #{tpu_custom_call.1} parent=1 // pred_check_branch
      %192 = sbr.rel (0) target = $region81
    $region80: #{tpu_custom_call.1} parent=1 // pred_region
      %194 = dma.done [#allocation15], 128
    $region81: #{tpu_custom_call.1} parent=1 // pred_fallthru
      _
    // Predicated region
    $region82: #{tpu_custom_call.1} parent=1 // pred_check
      _
    $region83: #{tpu_custom_call.1} parent=1 // pred_check_branch
      %196 = sbr.rel (0) target = $region85
    $region84: #{tpu_custom_call.1} parent=1 // pred_region
      %198 = dma.done [#allocation15], 2048
    $region85: #{tpu_custom_call.1} parent=1 // pred_fallthru
      _
    // Predicated region
    $region86: #{tpu_custom_call.1} parent=1 // pred_check
      _
    $region87: #{tpu_custom_call.1} parent=1 // pred_check_branch
      %200 = sbr.rel (0) target = $region89
    $region88: #{tpu_custom_call.1} parent=1 // pred_region
      %202 = dma.done [#allocation18], 2048
    $region89: #{tpu_custom_call.1} parent=1 // pred_fallthru
      _
    // Predicated region
    $region90: #{tpu_custom_call.1} parent=1 // pred_check
      _
    $region91: #{tpu_custom_call.1} parent=1 // pred_check_branch
      %204 = sbr.rel (0) target = $region93
    $region92: #{tpu_custom_call.1} parent=1 // pred_region
      %206 = dma.done [#allocation18], 2048
    $region93: #{tpu_custom_call.1} parent=1 // pred_fallthru
      _
    %v208 = vld [vmem:[#allocation2] sm:$0xff]
    %v209 = vld [vmem:[#allocation2 + $0x8] sm:$0xff]
    %v210 = vmul.f32 %v208, %v208
    %v211 = vmul.f32 %v209, %v209
    %212 = vadd.xlane.f32.xlu0 %v210
    %v213 = vpop.xlane.xlu0 %212
    %214 = vadd.xlane.f32.xlu0 %v211
    %v215 = vpop.xlane.xlu0 %214
    %v216 = vrcp.pop 128.0
    %v217 = vmul.f32 128.0, %v216
    %v218 = vsub.f32 1.0, %v217
    %v219 = vmul.f32 %v216, %v218
    %v220 = vadd.f32 %v216, %v219
    %vm221 = vweird.f32 %v216
    %v222 = vsel %vm221, %v216, %v220
    %v223 = vmul.f32 %v213, %v222
    %v224 = vmul.f32 %v215, %v222
    %v225 = vadd.f32 %v223, 1e-05
    %v226 = vadd.f32 %v224, 1e-05
    %v227 = vrsqrt.pop %v225
    %v228 = vmul.f32 %v227, %v225
    %v229 = vmul.f32 %v228, %v227
    %v230 = vmul.f32 0.5, %v229
    %v231 = vsub.f32 1.5, %v230
    %v232 = vmul.f32 %v227, %v231
    %vm233 = vweird.f32 %v225
    %vm234 = vweird.f32 %v227
    %vm235 = vmor %vm233, %vm234
    %v236 = vsel %vm235, %v227, %v232
    %v237 = vrsqrt.pop %v226
    %v238 = vmul.f32 %v237, %v226
    %v239 = vmul.f32 %v238, %v237
    %v240 = vmul.f32 0.5, %v239
    %v241 = vsub.f32 1.5, %v240
    %v242 = vmul.f32 %v237, %v241
    %vm243 = vweird.f32 %v226
    %vm244 = vweird.f32 %v237
    %vm245 = vmor %vm243, %vm244
    %v246 = vsel %vm245, %v237, %v242
    %v247 = vmul.f32 %v208, %v236
    %v248 = vmul.f32 %v209, %v246
    %v249 = vld [vmem:[#allocation5] sm:$0x1]
    %v251 = vperm.slane %v249, 0
    %v253 = vmul.f32 %v247, %v251
    %v254 = vmul.f32 %v248, %v251
    %v255 = vpack.c.bf16 %v254, %v253
    %v256 = vld [vmem:[#allocation7] sm:$0xf]
    %v257 = vld [vmem:[#allocation7 + $0x4] sm:$0xf]
    %v258 = vld [vmem:[#allocation7 + $0x8] sm:$0xf]
    %v259 = vld [vmem:[#allocation7 + $0xc] sm:$0xf]
    %v260 = vld [vmem:[#allocation7 + $0x10] sm:$0xf]
    %v261 = vld [vmem:[#allocation7 + $0x14] sm:$0xf]
    %v262 = vld [vmem:[#allocation7 + $0x18] sm:$0xf]
    %v263 = vld [vmem:[#allocation7 + $0x1c] sm:$0xf]
    %v264 = vld [vmem:[#allocation7 + $0x20] sm:$0xf]
    %v265 = vld [vmem:[#allocation7 + $0x24] sm:$0xf]
    %v266 = vld [vmem:[#allocation7 + $0x28] sm:$0xf]
    %v267 = vld [vmem:[#allocation7 + $0x2c] sm:$0xf]
    %v268 = vld [vmem:[#allocation7 + $0x30] sm:$0xf]
    %v269 = vld [vmem:[#allocation7 + $0x34] sm:$0xf]
    %v270 = vld [vmem:[#allocation7 + $0x38] sm:$0xf]
    %v271 = vld [vmem:[#allocation7 + $0x3c] sm:$0xf]
    %v288 = vunpack.c.l.b16 %v256
    %v289 = vunpack.c.l.b16 %v257
    %v290 = vunpack.c.l.b16 %v258
    %v291 = vunpack.c.l.b16 %v259
    %v292 = vunpack.c.l.b16 %v260
    %v293 = vunpack.c.l.b16 %v261
    %v294 = vunpack.c.l.b16 %v262
    %v295 = vunpack.c.l.b16 %v263
    %v296 = vunpack.c.l.b16 %v264
    %v297 = vunpack.c.l.b16 %v265
    %v298 = vunpack.c.l.b16 %v266
    %v299 = vunpack.c.l.b16 %v267
    %v300 = vunpack.c.l.b16 %v268
    %v301 = vunpack.c.l.b16 %v269
    %v302 = vunpack.c.l.b16 %v270
    %v303 = vunpack.c.l.b16 %v271
    %v304 = vpack.c.b16 %v289, %v288
    %v305 = vpack.c.b16 %v291, %v290
    %v306 = vpack.c.b16 %v293, %v292
    %v307 = vpack.c.b16 %v295, %v294
    %v308 = vpack.c.b16 %v297, %v296
    %v309 = vpack.c.b16 %v299, %v298
    %v310 = vpack.c.b16 %v301, %v300
    %v311 = vpack.c.b16 %v303, %v302
    %320 = vmatpush.bf16.msra.mxu0 %v311
    %321 = vmatpush.bf16.msra.mxu0 %v310
    %322 = vmatpush.bf16.msra.mxu0 %v309
    %323 = vmatpush.bf16.msra.mxu0 %v308
    %324 = vmatpush.bf16.msra.mxu0 %v307
    %325 = vmatpush.bf16.msra.mxu0 %v306
    %326 = vmatpush.bf16.msra.mxu0 %v305
    %327 = vmatpush.bf16.msra.mxu0 %v304
    %328 = vmatmul.bf16.gmra.mxu0 %v255
    %v329 = vpop.f32.mrf.mxu0
    %v330 = vadd.f32 0.0, %v329
    %v331 = vpop.f32.mrf.mxu0
    %v332 = vadd.f32 0.0, %v331
    %333 = vdwg.mxu0
    %v334 = vld [vmem:[#allocation8] sm:$0xf]
    %v335 = vld [vmem:[#allocation8 + $0x4] sm:$0xf]
    %v336 = vld [vmem:[#allocation8 + $0x8] sm:$0xf]
    %v337 = vld [vmem:[#allocation8 + $0xc] sm:$0xf]
    %v338 = vld [vmem:[#allocation8 + $0x10] sm:$0xf]
    %v339 = vld [vmem:[#allocation8 + $0x14] sm:$0xf]
    %v340 = vld [vmem:[#allocation8 + $0x18] sm:$0xf]
    %v341 = vld [vmem:[#allocation8 + $0x1c] sm:$0xf]
    %v342 = vld [vmem:[#allocation8 + $0x20] sm:$0xf]
    %v343 = vld [vmem:[#allocation8 + $0x24] sm:$0xf]
    %v344 = vld [vmem:[#allocation8 + $0x28] sm:$0xf]
    %v345 = vld [vmem:[#allocation8 + $0x2c] sm:$0xf]
    %v346 = vld [vmem:[#allocation8 + $0x30] sm:$0xf]
    %v347 = vld [vmem:[#allocation8 + $0x34] sm:$0xf]
    %v348 = vld [vmem:[#allocation8 + $0x38] sm:$0xf]
    %v349 = vld [vmem:[#allocation8 + $0x3c] sm:$0xf]
    %v366 = vunpack.c.l.b16 %v334
    %v367 = vunpack.c.l.b16 %v335
    %v368 = vunpack.c.l.b16 %v336
    %v369 = vunpack.c.l.b16 %v337
    %v370 = vunpack.c.l.b16 %v338
    %v371 = vunpack.c.l.b16 %v339
    %v372 = vunpack.c.l.b16 %v340
    %v373 = vunpack.c.l.b16 %v341
    %v374 = vunpack.c.l.b16 %v342
    %v375 = vunpack.c.l.b16 %v343
    %v376 = vunpack.c.l.b16 %v344
    %v377 = vunpack.c.l.b16 %v345
    %v378 = vunpack.c.l.b16 %v346
    %v379 = vunpack.c.l.b16 %v347
    %v380 = vunpack.c.l.b16 %v348
    %v381 = vunpack.c.l.b16 %v349
    %v382 = vpack.c.b16 %v367, %v366
    %v383 = vpack.c.b16 %v369, %v368
    %v384 = vpack.c.b16 %v371, %v370
    %v385 = vpack.c.b16 %v373, %v372
    %v386 = vpack.c.b16 %v375, %v374
    %v387 = vpack.c.b16 %v377, %v376
    %v388 = vpack.c.b16 %v379, %v378
    %v389 = vpack.c.b16 %v381, %v380
    %398 = vmatpush.bf16.msra.mxu0 %v389
    %399 = vmatpush.bf16.msra.mxu0 %v388
    %400 = vmatpush.bf16.msra.mxu0 %v387
    %401 = vmatpush.bf16.msra.mxu0 %v386
    %402 = vmatpush.bf16.msra.mxu0 %v385
    %403 = vmatpush.bf16.msra.mxu0 %v384
    %404 = vmatpush.bf16.msra.mxu0 %v383
    %405 = vmatpush.bf16.msra.mxu0 %v382
    %406 = vmatmul.bf16.gmra.mxu0 %v255
    %v407 = vpop.f32.mrf.mxu0
    %v408 = vadd.f32 0.0, %v407
    %v409 = vpop.f32.mrf.mxu0
    %v410 = vadd.f32 0.0, %v409
    %411 = vdwg.mxu0
    %v412 = vld [vmem:[#allocation10] sm:$0xf]
    %v413 = vld [vmem:[#allocation10 + $0x4] sm:$0xf]
    %v414 = vld [vmem:[#allocation10 + $0x8] sm:$0xf]
    %v415 = vld [vmem:[#allocation10 + $0xc] sm:$0xf]
    %v416 = vld [vmem:[#allocation10 + $0x10] sm:$0xf]
    %v417 = vld [vmem:[#allocation10 + $0x14] sm:$0xf]
    %v418 = vld [vmem:[#allocation10 + $0x18] sm:$0xf]
    %v419 = vld [vmem:[#allocation10 + $0x1c] sm:$0xf]
    %v420 = vld [vmem:[#allocation10 + $0x20] sm:$0xf]
    %v421 = vld [vmem:[#allocation10 + $0x24] sm:$0xf]
    %v422 = vld [vmem:[#allocation10 + $0x28] sm:$0xf]
    %v423 = vld [vmem:[#allocation10 + $0x2c] sm:$0xf]
    %v424 = vld [vmem:[#allocation10 + $0x30] sm:$0xf]
    %v425 = vld [vmem:[#allocation10 + $0x34] sm:$0xf]
    %v426 = vld [vmem:[#allocation10 + $0x38] sm:$0xf]
    %v427 = vld [vmem:[#allocation10 + $0x3c] sm:$0xf]
    %v444 = vunpack.c.l.b16 %v412
    %v445 = vunpack.c.l.b16 %v413
    %v446 = vunpack.c.l.b16 %v414
    %v447 = vunpack.c.l.b16 %v415
    %v448 = vunpack.c.l.b16 %v416
    %v449 = vunpack.c.l.b16 %v417
    %v450 = vunpack.c.l.b16 %v418
    %v451 = vunpack.c.l.b16 %v419
    %v452 = vunpack.c.l.b16 %v420
    %v453 = vunpack.c.l.b16 %v421
    %v454 = vunpack.c.l.b16 %v422
    %v455 = vunpack.c.l.b16 %v423
    %v456 = vunpack.c.l.b16 %v424
    %v457 = vunpack.c.l.b16 %v425
    %v458 = vunpack.c.l.b16 %v426
    %v459 = vunpack.c.l.b16 %v427
    %v460 = vpack.c.b16 %v445, %v444
    %v461 = vpack.c.b16 %v447, %v446
    %v462 = vpack.c.b16 %v449, %v448
    %v463 = vpack.c.b16 %v451, %v450
    %v464 = vpack.c.b16 %v453, %v452
    %v465 = vpack.c.b16 %v455, %v454
    %v466 = vpack.c.b16 %v457, %v456
    %v467 = vpack.c.b16 %v459, %v458
    %476 = vmatpush.bf16.msra.mxu0 %v467
    %477 = vmatpush.bf16.msra.mxu0 %v466
    %478 = vmatpush.bf16.msra.mxu0 %v465
    %479 = vmatpush.bf16.msra.mxu0 %v464
    %480 = vmatpush.bf16.msra.mxu0 %v463
    %481 = vmatpush.bf16.msra.mxu0 %v462
    %482 = vmatpush.bf16.msra.mxu0 %v461
    %483 = vmatpush.bf16.msra.mxu0 %v460
    %484 = vmatmul.bf16.gmra.mxu0 %v255
    %v485 = vpop.f32.mrf.mxu0
    %v486 = vadd.f32 0.0, %v485
    %v487 = vpop.f32.mrf.mxu0
    %v488 = vadd.f32 0.0, %v487
    %489 = vdwg.mxu0
    %491 = vrot.lane.b32.xlu0 %v330, 96
    %v492 = vpop.permute.xlu0 %491
    %494 = vrot.lane.b32.xlu0 %v330, 64
    %v495 = vpop.permute.xlu0 %494
    %497 = vrot.lane.b32.xlu0 %v330, 32
    %v498 = vpop.permute.xlu0 %497
    %501 = vrot.lane.b32.xlu0 %v332, 96
    %v502 = vpop.permute.xlu0 %501
    %504 = vrot.lane.b32.xlu0 %v332, 64
    %v505 = vpop.permute.xlu0 %504
    %507 = vrot.lane.b32.xlu0 %v332, 32
    %v508 = vpop.permute.xlu0 %507
    %511 = vrot.lane.b32.xlu0 %v408, 96
    %v512 = vpop.permute.xlu0 %511
    %514 = vrot.lane.b32.xlu0 %v408, 64
    %v515 = vpop.permute.xlu0 %514
    %517 = vrot.lane.b32.xlu0 %v408, 32
    %v518 = vpop.permute.xlu0 %517
    %521 = vrot.lane.b32.xlu0 %v410, 96
    %v522 = vpop.permute.xlu0 %521
    %524 = vrot.lane.b32.xlu0 %v410, 64
    %v525 = vpop.permute.xlu0 %524
    %527 = vrot.lane.b32.xlu0 %v410, 32
    %v528 = vpop.permute.xlu0 %527
    %531 = vrot.lane.b32.xlu0 %v486, 96
    %v532 = vpop.permute.xlu0 %531
    %534 = vrot.lane.b32.xlu0 %v486, 64
    %v535 = vpop.permute.xlu0 %534
    %537 = vrot.lane.b32.xlu0 %v486, 32
    %v538 = vpop.permute.xlu0 %537
    %541 = vrot.lane.b32.xlu0 %v488, 96
    %v542 = vpop.permute.xlu0 %541
    %544 = vrot.lane.b32.xlu0 %v488, 64
    %v545 = vpop.permute.xlu0 %544
    %547 = vrot.lane.b32.xlu0 %v488, 32
    %v548 = vpop.permute.xlu0 %547
    %v550 = vld [vmem:[#allocation13] sm:$0xff]
    %v551 = vld [vmem:[#allocation14] sm:$0xff]
    %552 = vrot.lane.b32.xlu0 %v330, 112
    %v553 = vpop.permute.xlu0 %552
    %554 = vrot.lane.b32.xlu0 %v492, 112
    %v555 = vpop.permute.xlu0 %554
    %556 = vrot.lane.b32.xlu0 %v495, 112
    %v557 = vpop.permute.xlu0 %556
    %558 = vrot.lane.b32.xlu0 %v498, 112
    %v559 = vpop.permute.xlu0 %558
    %560 = vrot.lane.b32.xlu0 %v332, 112
    %v561 = vpop.permute.xlu0 %560
    %562 = vrot.lane.b32.xlu0 %v502, 112
    %v563 = vpop.permute.xlu0 %562
    %564 = vrot.lane.b32.xlu0 %v505, 112
    %v565 = vpop.permute.xlu0 %564
    %566 = vrot.lane.b32.xlu0 %v508, 112
    %v567 = vpop.permute.xlu0 %566
    %576 = vrot.lane.b32.xlu0 %v330, 16
    %v577 = vpop.permute.xlu0 %576
    %578 = vrot.lane.b32.xlu0 %v492, 16
    %v579 = vpop.permute.xlu0 %578
    %580 = vrot.lane.b32.xlu0 %v495, 16
    %v581 = vpop.permute.xlu0 %580
    %582 = vrot.lane.b32.xlu0 %v498, 16
    %v583 = vpop.permute.xlu0 %582
    %584 = vrot.lane.b32.xlu0 %v332, 16
    %v585 = vpop.permute.xlu0 %584
    %586 = vrot.lane.b32.xlu0 %v502, 16
    %v587 = vpop.permute.xlu0 %586
    %588 = vrot.lane.b32.xlu0 %v505, 16
    %v589 = vpop.permute.xlu0 %588
    %590 = vrot.lane.b32.xlu0 %v508, 16
    %v591 = vpop.permute.xlu0 %590
    %vm600 = vcmask 130048
    %v601 = vsel %vm600, %v553, %v577
    %v602 = vsel %vm600, %v555, %v579
    %v603 = vsel %vm600, %v557, %v581
    %v604 = vsel %vm600, %v559, %v583
    %v605 = vsel %vm600, %v561, %v585
    %v606 = vsel %vm600, %v563, %v587
    %v607 = vsel %vm600, %v565, %v589
    %v608 = vsel %vm600, %v567, %v591
    %v609 = vmul.f32 %v330, %v550
    %v610 = vmul.f32 %v492, %v550
    %v611 = vmul.f32 %v495, %v550
    %v612 = vmul.f32 %v498, %v550
    %v613 = vmul.f32 %v332, %v550
    %v614 = vmul.f32 %v502, %v550
    %v615 = vmul.f32 %v505, %v550
    %v616 = vmul.f32 %v508, %v550
    %v617 = vmul.f32 %v601, %v551
    %v618 = vmul.f32 %v602, %v551
    %v619 = vmul.f32 %v603, %v551
    %v620 = vmul.f32 %v604, %v551
    %v621 = vmul.f32 %v605, %v551
    %v622 = vmul.f32 %v606, %v551
    %v623 = vmul.f32 %v607, %v551
    %v624 = vmul.f32 %v608, %v551
    %v625 = vadd.f32 %v609, %v617
    %v626 = vadd.f32 %v610, %v618
    %v627 = vadd.f32 %v611, %v619
    %v628 = vadd.f32 %v612, %v620
    %v629 = vadd.f32 %v613, %v621
    %v630 = vadd.f32 %v614, %v622
    %v631 = vadd.f32 %v615, %v623
    %v632 = vadd.f32 %v616, %v624
    %633 = vrot.lane.b32.xlu0 %v408, 112
    %v634 = vpop.permute.xlu0 %633
    %635 = vrot.lane.b32.xlu0 %v512, 112
    %v636 = vpop.permute.xlu0 %635
    %637 = vrot.lane.b32.xlu0 %v515, 112
    %v638 = vpop.permute.xlu0 %637
    %639 = vrot.lane.b32.xlu0 %v518, 112
    %v640 = vpop.permute.xlu0 %639
    %641 = vrot.lane.b32.xlu0 %v410, 112
    %v642 = vpop.permute.xlu0 %641
    %643 = vrot.lane.b32.xlu0 %v522, 112
    %v644 = vpop.permute.xlu0 %643
    %645 = vrot.lane.b32.xlu0 %v525, 112
    %v646 = vpop.permute.xlu0 %645
    %647 = vrot.lane.b32.xlu0 %v528, 112
    %v648 = vpop.permute.xlu0 %647
    %657 = vrot.lane.b32.xlu0 %v408, 16
    %v658 = vpop.permute.xlu0 %657
    %659 = vrot.lane.b32.xlu0 %v512, 16
    %v660 = vpop.permute.xlu0 %659
    %661 = vrot.lane.b32.xlu0 %v515, 16
    %v662 = vpop.permute.xlu0 %661
    %663 = vrot.lane.b32.xlu0 %v518, 16
    %v664 = vpop.permute.xlu0 %663
    %665 = vrot.lane.b32.xlu0 %v410, 16
    %v666 = vpop.permute.xlu0 %665
    %667 = vrot.lane.b32.xlu0 %v522, 16
    %v668 = vpop.permute.xlu0 %667
    %669 = vrot.lane.b32.xlu0 %v525, 16
    %v670 = vpop.permute.xlu0 %669
    %671 = vrot.lane.b32.xlu0 %v528, 16
    %v672 = vpop.permute.xlu0 %671
    %v681 = vsel %vm600, %v634, %v658
    %v682 = vsel %vm600, %v636, %v660
    %v683 = vsel %vm600, %v638, %v662
    %v684 = vsel %vm600, %v640, %v664
    %v685 = vsel %vm600, %v642, %v666
    %v686 = vsel %vm600, %v644, %v668
    %v687 = vsel %vm600, %v646, %v670
    %v688 = vsel %vm600, %v648, %v672
    %v689 = vmul.f32 %v408, %v550
    %v690 = vmul.f32 %v512, %v550
    %v691 = vmul.f32 %v515, %v550
    %v692 = vmul.f32 %v518, %v550
    %v693 = vmul.f32 %v410, %v550
    %v694 = vmul.f32 %v522, %v550
    %v695 = vmul.f32 %v525, %v550
    %v696 = vmul.f32 %v528, %v550
    %v697 = vmul.f32 %v681, %v551
    %v698 = vmul.f32 %v682, %v551
    %v699 = vmul.f32 %v683, %v551
    %v700 = vmul.f32 %v684, %v551
    %v701 = vmul.f32 %v685, %v551
    %v702 = vmul.f32 %v686, %v551
    %v703 = vmul.f32 %v687, %v551
    %v704 = vmul.f32 %v688, %v551
    %v705 = vadd.f32 %v689, %v697
    %v706 = vadd.f32 %v690, %v698
    %v707 = vadd.f32 %v691, %v699
    %v708 = vadd.f32 %v692, %v700
    %v709 = vadd.f32 %v693, %v701
    %v710 = vadd.f32 %v694, %v702
    %v711 = vadd.f32 %v695, %v703
    %v712 = vadd.f32 %v696, %v704
    %v713 = vpack.c.bf16 %v625, %v625
    %v714 = vpack.c.bf16 %v626, %v626
    %v715 = vpack.c.bf16 %v627, %v627
    %v716 = vpack.c.bf16 %v628, %v628
    %v717 = vpack.c.bf16 %v629, %v629
    %v718 = vpack.c.bf16 %v630, %v630
    %v719 = vpack.c.bf16 %v631, %v631
    %v720 = vpack.c.bf16 %v632, %v632
    %v721 = vpack.c.bf16 %v705, %v705
    %v722 = vpack.c.bf16 %v706, %v706
    %v723 = vpack.c.bf16 %v707, %v707
    %v724 = vpack.c.bf16 %v708, %v708
    %v725 = vpack.c.bf16 %v709, %v709
    %v726 = vpack.c.bf16 %v710, %v710
    %v727 = vpack.c.bf16 %v711, %v711
    %v728 = vpack.c.bf16 %v712, %v712
    %vm729 = vcmask 261120
    %v731 = vsel %vm729, %v713, 0
    %v734 = vsel %vm729, %v721, 0
    %736 = vmatpush.bf16.xpose.msra.mxu0 0
    %737 = vmatpush.bf16.xpose.msra.mxu0 0
    %738 = vmatpush.bf16.xpose.msra.mxu0 0
    %739 = vmatpush.bf16.xpose.msra.mxu0 0
    %740 = vmatpush.bf16.xpose.msra.mxu0 0
    %741 = vmatpush.bf16.xpose.msra.mxu0 0
    %742 = vmatpush.bf16.xpose.msra.mxu0 0
    %743 = vmatpush.bf16.xpose.msra.mxu0 %v734
    %744 = vmatmul.bf16.gmra.mxu0 %v731
    %v745 = vpop.f32.mrf.mxu0
    %v746 = vadd.f32 0.0, %v745
    %v747 = vpop.f32.mrf.mxu0
    %748 = vdwg.mxu0
    %v750 = vsel %vm729, %v714, 0
    %v753 = vsel %vm729, %v722, 0
    %755 = vmatpush.bf16.xpose.msra.mxu0 0
    %756 = vmatpush.bf16.xpose.msra.mxu0 0
    %757 = vmatpush.bf16.xpose.msra.mxu0 0
    %758 = vmatpush.bf16.xpose.msra.mxu0 0
    %759 = vmatpush.bf16.xpose.msra.mxu0 0
    %760 = vmatpush.bf16.xpose.msra.mxu0 0
    %761 = vmatpush.bf16.xpose.msra.mxu0 0
    %762 = vmatpush.bf16.xpose.msra.mxu0 %v753
    %763 = vmatmul.bf16.gmra.mxu0 %v750
    %v764 = vpop.f32.mrf.mxu0
    %v765 = vadd.f32 0.0, %v764
    %v766 = vpop.f32.mrf.mxu0
    %767 = vdwg.mxu0
    %v769 = vsel %vm729, %v715, 0
    %v772 = vsel %vm729, %v723, 0
    %774 = vmatpush.bf16.xpose.msra.mxu0 0
    %775 = vmatpush.bf16.xpose.msra.mxu0 0
    %776 = vmatpush.bf16.xpose.msra.mxu0 0
    %777 = vmatpush.bf16.xpose.msra.mxu0 0
    %778 = vmatpush.bf16.xpose.msra.mxu0 0
    %779 = vmatpush.bf16.xpose.msra.mxu0 0
    %780 = vmatpush.bf16.xpose.msra.mxu0 0
    %781 = vmatpush.bf16.xpose.msra.mxu0 %v772
    %782 = vmatmul.bf16.gmra.mxu0 %v769
    %v783 = vpop.f32.mrf.mxu0
    %v784 = vadd.f32 0.0, %v783
    %v785 = vpop.f32.mrf.mxu0
    %786 = vdwg.mxu0
    %v788 = vsel %vm729, %v716, 0
    %v791 = vsel %vm729, %v724, 0
    %793 = vmatpush.bf16.xpose.msra.mxu0 0
    %794 = vmatpush.bf16.xpose.msra.mxu0 0
    %795 = vmatpush.bf16.xpose.msra.mxu0 0
    %796 = vmatpush.bf16.xpose.msra.mxu0 0
    %797 = vmatpush.bf16.xpose.msra.mxu0 0
    %798 = vmatpush.bf16.xpose.msra.mxu0 0
    %799 = vmatpush.bf16.xpose.msra.mxu0 0
    %800 = vmatpush.bf16.xpose.msra.mxu0 %v791
    %801 = vmatmul.bf16.gmra.mxu0 %v788
    %v802 = vpop.f32.mrf.mxu0
    %v803 = vadd.f32 0.0, %v802
    %v804 = vpop.f32.mrf.mxu0
    %805 = vdwg.mxu0
    %v807 = vsel %vm729, %v717, 0
    %v810 = vsel %vm729, %v725, 0
    %812 = vmatpush.bf16.xpose.msra.mxu0 0
    %813 = vmatpush.bf16.xpose.msra.mxu0 0
    %814 = vmatpush.bf16.xpose.msra.mxu0 0
    %815 = vmatpush.bf16.xpose.msra.mxu0 0
    %816 = vmatpush.bf16.xpose.msra.mxu0 0
    %817 = vmatpush.bf16.xpose.msra.mxu0 0
    %818 = vmatpush.bf16.xpose.msra.mxu0 0
    %819 = vmatpush.bf16.xpose.msra.mxu0 %v810
    %820 = vmatmul.bf16.gmra.mxu0 %v807
    %v821 = vpop.f32.mrf.mxu0
    %v822 = vadd.f32 0.0, %v821
    %v823 = vpop.f32.mrf.mxu0
    %824 = vdwg.mxu0
    %v826 = vsel %vm729, %v718, 0
    %v829 = vsel %vm729, %v726, 0
    %831 = vmatpush.bf16.xpose.msra.mxu0 0
    %832 = vmatpush.bf16.xpose.msra.mxu0 0
    %833 = vmatpush.bf16.xpose.msra.mxu0 0
    %834 = vmatpush.bf16.xpose.msra.mxu0 0
    %835 = vmatpush.bf16.xpose.msra.mxu0 0
    %836 = vmatpush.bf16.xpose.msra.mxu0 0
    %837 = vmatpush.bf16.xpose.msra.mxu0 0
    %838 = vmatpush.bf16.xpose.msra.mxu0 %v829
    %839 = vmatmul.bf16.gmra.mxu0 %v826
    %v840 = vpop.f32.mrf.mxu0
    %v841 = vadd.f32 0.0, %v840
    %v842 = vpop.f32.mrf.mxu0
    %843 = vdwg.mxu0
    %v845 = vsel %vm729, %v719, 0
    %v848 = vsel %vm729, %v727, 0
    %850 = vmatpush.bf16.xpose.msra.mxu0 0
    %851 = vmatpush.bf16.xpose.msra.mxu0 0
    %852 = vmatpush.bf16.xpose.msra.mxu0 0
    %853 = vmatpush.bf16.xpose.msra.mxu0 0
    %854 = vmatpush.bf16.xpose.msra.mxu0 0
    %855 = vmatpush.bf16.xpose.msra.mxu0 0
    %856 = vmatpush.bf16.xpose.msra.mxu0 0
    %857 = vmatpush.bf16.xpose.msra.mxu0 %v848
    %858 = vmatmul.bf16.gmra.mxu0 %v845
    %v859 = vpop.f32.mrf.mxu0
    %v860 = vadd.f32 0.0, %v859
    %v861 = vpop.f32.mrf.mxu0
    %862 = vdwg.mxu0
    %v864 = vsel %vm729, %v720, 0
    %v867 = vsel %vm729, %v728, 0
    %869 = vmatpush.bf16.xpose.msra.mxu0 0
    %870 = vmatpush.bf16.xpose.msra.mxu0 0
    %871 = vmatpush.bf16.xpose.msra.mxu0 0
    %872 = vmatpush.bf16.xpose.msra.mxu0 0
    %873 = vmatpush.bf16.xpose.msra.mxu0 0
    %874 = vmatpush.bf16.xpose.msra.mxu0 0
    %875 = vmatpush.bf16.xpose.msra.mxu0 0
    %876 = vmatpush.bf16.xpose.msra.mxu0 %v867
    %877 = vmatmul.bf16.gmra.mxu0 %v864
    %v878 = vpop.f32.mrf.mxu0
    %v879 = vadd.f32 0.0, %v878
    %v880 = vpop.f32.mrf.mxu0
    %881 = vdwg.mxu0
    %v882 = vlaneseq
    %v883 = vshrl.u32 %v882, 7
    %v884 = vlaneseq
    %v885 = vand.u32 %v884, 127
    %vm886 = vcmp.gt.s32.totalorder %v885, %v883
    %v887 = vsel %vm886, 1, 0
    %vm888 = vcmp.eq.s32.totalorder %v887, 1
    %v889 = vsel %vm888, -inf, %v746
    %v890 = vsel %vm888, -inf, %v765
    %v891 = vsel %vm888, -inf, %v784
    %v892 = vsel %vm888, -inf, %v803
    %v893 = vsel %vm888, -inf, %v822
    %v894 = vsel %vm888, -inf, %v841
    %v895 = vsel %vm888, -inf, %v860
    %v896 = vsel %vm888, -inf, %v879
    %vm897 = vcmask 64512
    %v898 = vsel %vm897, %v889, -inf
    %899 = vmax.xlane.f32.xlu0 %v898
    %v900 = vpop.xlane.xlu0 %899
    %v901 = vsel %vm897, %v890, -inf
    %902 = vmax.xlane.f32.xlu0 %v901
    %v903 = vpop.xlane.xlu0 %902
    %v904 = vsel %vm897, %v891, -inf
    %905 = vmax.xlane.f32.xlu0 %v904
    %v906 = vpop.xlane.xlu0 %905
    %v907 = vsel %vm897, %v892, -inf
    %908 = vmax.xlane.f32.xlu0 %v907
    %v909 = vpop.xlane.xlu0 %908
    %v910 = vsel %vm897, %v893, -inf
    %911 = vmax.xlane.f32.xlu0 %v910
    %v912 = vpop.xlane.xlu0 %911
    %v913 = vsel %vm897, %v894, -inf
    %914 = vmax.xlane.f32.xlu0 %v913
    %v915 = vpop.xlane.xlu0 %914
    %v916 = vsel %vm897, %v895, -inf
    %917 = vmax.xlane.f32.xlu0 %v916
    %v918 = vpop.xlane.xlu0 %917
    %v919 = vsel %vm897, %v896, -inf
    %920 = vmax.xlane.f32.xlu0 %v919
    %v921 = vpop.xlane.xlu0 %920
    %v922 = vsub.f32 %v889, %v900
    %v923 = vsub.f32 %v890, %v903
    %v924 = vsub.f32 %v891, %v906
    %v925 = vsub.f32 %v892, %v909
    %v926 = vsub.f32 %v893, %v912
    %v927 = vsub.f32 %v894, %v915
    %v928 = vsub.f32 %v895, %v918
    %v929 = vsub.f32 %v896, %v921
    %v930 = vmul.f32 %v922, 1.442695
    %v931 = vpow.pop %v930
    %v932 = vmul.f32 %v923, 1.442695
    %v933 = vpow.pop %v932
    %v934 = vmul.f32 %v924, 1.442695
    %v935 = vpow.pop %v934
    %v936 = vmul.f32 %v925, 1.442695
    %v937 = vpow.pop %v936
    %v938 = vmul.f32 %v926, 1.442695
    %v939 = vpow.pop %v938
    %v940 = vmul.f32 %v927, 1.442695
    %v941 = vpow.pop %v940
    %v942 = vmul.f32 %v928, 1.442695
    %v943 = vpow.pop %v942
    %v944 = vmul.f32 %v929, 1.442695
    %v945 = vpow.pop %v944
    %v946 = vsel %vm897, %v931, 0.0
    %947 = vadd.xlane.f32.xlu0 %v946
    %v948 = vpop.xlane.xlu0 %947
    %v949 = vsel %vm897, %v933, 0.0
    %950 = vadd.xlane.f32.xlu0 %v949
    %v951 = vpop.xlane.xlu0 %950
    %v952 = vsel %vm897, %v935, 0.0
    %953 = vadd.xlane.f32.xlu0 %v952
    %v954 = vpop.xlane.xlu0 %953
    %v955 = vsel %vm897, %v937, 0.0
    %956 = vadd.xlane.f32.xlu0 %v955
    %v957 = vpop.xlane.xlu0 %956
    %v958 = vsel %vm897, %v939, 0.0
    %959 = vadd.xlane.f32.xlu0 %v958
    %v960 = vpop.xlane.xlu0 %959
    %v961 = vsel %vm897, %v941, 0.0
    %962 = vadd.xlane.f32.xlu0 %v961
    %v963 = vpop.xlane.xlu0 %962
    %v964 = vsel %vm897, %v943, 0.0
    %965 = vadd.xlane.f32.xlu0 %v964
    %v966 = vpop.xlane.xlu0 %965
    %v967 = vsel %vm897, %v945, 0.0
    %968 = vadd.xlane.f32.xlu0 %v967
    %v969 = vpop.xlane.xlu0 %968
    %v970 = vpack.c.bf16 %v931, %v931
    %v971 = vpack.c.bf16 %v933, %v933
    %v972 = vpack.c.bf16 %v935, %v935
    %v973 = vpack.c.bf16 %v937, %v937
    %v974 = vpack.c.bf16 %v939, %v939
    %v975 = vpack.c.bf16 %v941, %v941
    %v976 = vpack.c.bf16 %v943, %v943
    %v977 = vpack.c.bf16 %v945, %v945
    %v978 = vpack.c.bf16 %v486, %v486
    %v979 = vpack.c.bf16 %v532, %v532
    %v980 = vpack.c.bf16 %v535, %v535
    %v981 = vpack.c.bf16 %v538, %v538
    %v982 = vpack.c.bf16 %v488, %v488
    %v983 = vpack.c.bf16 %v542, %v542
    %v984 = vpack.c.bf16 %v545, %v545
    %v985 = vpack.c.bf16 %v548, %v548
    %v987 = vsel %vm897, %v970, 0
    %vm989 = vcmask 1043456
    %v991 = vsel %vm989, %v978, 0
    %993 = vmatpush.bf16.msra.mxu0 0
    %994 = vmatpush.bf16.msra.mxu0 0
    %995 = vmatpush.bf16.msra.mxu0 0
    %996 = vmatpush.bf16.msra.mxu0 0
    %997 = vmatpush.bf16.msra.mxu0 0
    %998 = vmatpush.bf16.msra.mxu0 0
    %999 = vmatpush.bf16.msra.mxu0 0
    %1000 = vmatpush.bf16.msra.mxu0 %v991
    %1001 = vmatmul.bf16.gmra.mxu0 %v987
    %v1002 = vpop.f32.mrf.mxu0
    %v1003 = vadd.f32 0.0, %v1002
    %v1004 = vpop.f32.mrf.mxu0
    %1005 = vdwg.mxu0
    %v1007 = vsel %vm897, %v971, 0
    %v1010 = vsel %vm989, %v979, 0
    %1012 = vmatpush.bf16.msra.mxu0 0
    %1013 = vmatpush.bf16.msra.mxu0 0
    %1014 = vmatpush.bf16.msra.mxu0 0
    %1015 = vmatpush.bf16.msra.mxu0 0
    %1016 = vmatpush.bf16.msra.mxu0 0
    %1017 = vmatpush.bf16.msra.mxu0 0
    %1018 = vmatpush.bf16.msra.mxu0 0
    %1019 = vmatpush.bf16.msra.mxu0 %v1010
    %1020 = vmatmul.bf16.gmra.mxu0 %v1007
    %v1021 = vpop.f32.mrf.mxu0
    %v1022 = vadd.f32 0.0, %v1021
    %v1023 = vpop.f32.mrf.mxu0
    %1024 = vdwg.mxu0
    %v1026 = vsel %vm897, %v972, 0
    %v1029 = vsel %vm989, %v980, 0
    %1031 = vmatpush.bf16.msra.mxu0 0
    %1032 = vmatpush.bf16.msra.mxu0 0
    %1033 = vmatpush.bf16.msra.mxu0 0
    %1034 = vmatpush.bf16.msra.mxu0 0
    %1035 = vmatpush.bf16.msra.mxu0 0
    %1036 = vmatpush.bf16.msra.mxu0 0
    %1037 = vmatpush.bf16.msra.mxu0 0
    %1038 = vmatpush.bf16.msra.mxu0 %v1029
    %1039 = vmatmul.bf16.gmra.mxu0 %v1026
    %v1040 = vpop.f32.mrf.mxu0
    %v1041 = vadd.f32 0.0, %v1040
    %v1042 = vpop.f32.mrf.mxu0
    %1043 = vdwg.mxu0
    %v1045 = vsel %vm897, %v973, 0
    %v1048 = vsel %vm989, %v981, 0
    %1050 = vmatpush.bf16.msra.mxu0 0
    %1051 = vmatpush.bf16.msra.mxu0 0
    %1052 = vmatpush.bf16.msra.mxu0 0
    %1053 = vmatpush.bf16.msra.mxu0 0
    %1054 = vmatpush.bf16.msra.mxu0 0
    %1055 = vmatpush.bf16.msra.mxu0 0
    %1056 = vmatpush.bf16.msra.mxu0 0
    %1057 = vmatpush.bf16.msra.mxu0 %v1048
    %1058 = vmatmul.bf16.gmra.mxu0 %v1045
    %v1059 = vpop.f32.mrf.mxu0
    %v1060 = vadd.f32 0.0, %v1059
    %v1061 = vpop.f32.mrf.mxu0
    %1062 = vdwg.mxu0
    %v1064 = vsel %vm897, %v974, 0
    %v1067 = vsel %vm989, %v982, 0
    %1069 = vmatpush.bf16.msra.mxu0 0
    %1070 = vmatpush.bf16.msra.mxu0 0
    %1071 = vmatpush.bf16.msra.mxu0 0
    %1072 = vmatpush.bf16.msra.mxu0 0
    %1073 = vmatpush.bf16.msra.mxu0 0
    %1074 = vmatpush.bf16.msra.mxu0 0
    %1075 = vmatpush.bf16.msra.mxu0 0
    %1076 = vmatpush.bf16.msra.mxu0 %v1067
    %1077 = vmatmul.bf16.gmra.mxu0 %v1064
    %v1078 = vpop.f32.mrf.mxu0
    %v1079 = vadd.f32 0.0, %v1078
    %v1080 = vpop.f32.mrf.mxu0
    %1081 = vdwg.mxu0
    %v1083 = vsel %vm897, %v975, 0
    %v1086 = vsel %vm989, %v983, 0
    %1088 = vmatpush.bf16.msra.mxu0 0
    %1089 = vmatpush.bf16.msra.mxu0 0
    %1090 = vmatpush.bf16.msra.mxu0 0
    %1091 = vmatpush.bf16.msra.mxu0 0
    %1092 = vmatpush.bf16.msra.mxu0 0
    %1093 = vmatpush.bf16.msra.mxu0 0
    %1094 = vmatpush.bf16.msra.mxu0 0
    %1095 = vmatpush.bf16.msra.mxu0 %v1086
    %1096 = vmatmul.bf16.gmra.mxu0 %v1083
    %v1097 = vpop.f32.mrf.mxu0
    %v1098 = vadd.f32 0.0, %v1097
    %v1099 = vpop.f32.mrf.mxu0
    %1100 = vdwg.mxu0
    %v1102 = vsel %vm897, %v976, 0
    %v1105 = vsel %vm989, %v984, 0
    %1107 = vmatpush.bf16.msra.mxu0 0
    %1108 = vmatpush.bf16.msra.mxu0 0
    %1109 = vmatpush.bf16.msra.mxu0 0
    %1110 = vmatpush.bf16.msra.mxu0 0
    %1111 = vmatpush.bf16.msra.mxu0 0
    %1112 = vmatpush.bf16.msra.mxu0 0
    %1113 = vmatpush.bf16.msra.mxu0 0
    %1114 = vmatpush.bf16.msra.mxu0 %v1105
    %1115 = vmatmul.bf16.gmra.mxu0 %v1102
    %v1116 = vpop.f32.mrf.mxu0
    %v1117 = vadd.f32 0.0, %v1116
    %v1118 = vpop.f32.mrf.mxu0
    %1119 = vdwg.mxu0
    %v1121 = vsel %vm897, %v977, 0
    %v1124 = vsel %vm989, %v985, 0
    %1126 = vmatpush.bf16.msra.mxu0 0
    %1127 = vmatpush.bf16.msra.mxu0 0
    %1128 = vmatpush.bf16.msra.mxu0 0
    %1129 = vmatpush.bf16.msra.mxu0 0
    %1130 = vmatpush.bf16.msra.mxu0 0
    %1131 = vmatpush.bf16.msra.mxu0 0
    %1132 = vmatpush.bf16.msra.mxu0 0
    %1133 = vmatpush.bf16.msra.mxu0 %v1124
    %1134 = vmatmul.bf16.gmra.mxu0 %v1121
    %v1135 = vpop.f32.mrf.mxu0
    %v1136 = vadd.f32 0.0, %v1135
    %v1137 = vpop.f32.mrf.mxu0
    %1138 = vdwg.mxu0
    %v1139 = vrcp.pop %v948
    %v1140 = vrcp.pop %v951
    %v1141 = vrcp.pop %v954
    %v1142 = vrcp.pop %v957
    %v1143 = vrcp.pop %v960
    %v1144 = vrcp.pop %v963
    %v1145 = vrcp.pop %v966
    %v1146 = vrcp.pop %v969
    %v1147 = vmul.f32 %v1003, %v1139
    %v1148 = vmul.f32 %v1022, %v1140
    %v1149 = vmul.f32 %v1041, %v1141
    %v1150 = vmul.f32 %v1060, %v1142
    %v1151 = vmul.f32 %v1079, %v1143
    %v1152 = vmul.f32 %v1098, %v1144
    %v1153 = vmul.f32 %v1117, %v1145
    %v1154 = vmul.f32 %v1136, %v1146
    %1156 = vrot.lane.b32.xlu0 %v1148, 32
    %v1157 = vpop.permute.xlu0 %1156
    %1160 = vrot.lane.b32.xlu0 %v1149, 64
    %v1161 = vpop.permute.xlu0 %1160
    %1164 = vrot.lane.b32.xlu0 %v1150, 96
    %v1165 = vpop.permute.xlu0 %1164
    %v1167 = vsel %vm729, %v1147, %v1157
    %vm1168 = vcmask 523264
    %v1169 = vsel %vm1168, %v1167, %v1161
    %vm1170 = vcmask 785408
    %v1171 = vsel %vm1170, %v1169, %v1165
    %1173 = vrot.lane.b32.xlu0 %v1152, 32
    %v1174 = vpop.permute.xlu0 %1173
    %1177 = vrot.lane.b32.xlu0 %v1153, 64
    %v1178 = vpop.permute.xlu0 %1177
    %1181 = vrot.lane.b32.xlu0 %v1154, 96
    %v1182 = vpop.permute.xlu0 %1181
    %v1184 = vsel %vm729, %v1151, %v1174
    %v1185 = vsel %vm1168, %v1184, %v1178
    %v1186 = vsel %vm1170, %v1185, %v1182
    %v1187 = vpack.c.bf16 %v1186, %v1171
    %v1188 = vld [vmem:[#allocation11] sm:$0xf]
    %v1189 = vld [vmem:[#allocation11 + $0x4] sm:$0xf]
    %v1190 = vld [vmem:[#allocation11 + $0x8] sm:$0xf]
    %v1191 = vld [vmem:[#allocation11 + $0xc] sm:$0xf]
    %v1192 = vld [vmem:[#allocation11 + $0x10] sm:$0xf]
    %v1193 = vld [vmem:[#allocation11 + $0x14] sm:$0xf]
    %v1194 = vld [vmem:[#allocation11 + $0x18] sm:$0xf]
    %v1195 = vld [vmem:[#allocation11 + $0x1c] sm:$0xf]
    %v1196 = vld [vmem:[#allocation11 + $0x20] sm:$0xf]
    %v1197 = vld [vmem:[#allocation11 + $0x24] sm:$0xf]
    %v1198 = vld [vmem:[#allocation11 + $0x28] sm:$0xf]
    %v1199 = vld [vmem:[#allocation11 + $0x2c] sm:$0xf]
    %v1200 = vld [vmem:[#allocation11 + $0x30] sm:$0xf]
    %v1201 = vld [vmem:[#allocation11 + $0x34] sm:$0xf]
    %v1202 = vld [vmem:[#allocation11 + $0x38] sm:$0xf]
    %v1203 = vld [vmem:[#allocation11 + $0x3c] sm:$0xf]
    %v1220 = vunpack.c.l.b16 %v1188
    %v1221 = vunpack.c.l.b16 %v1189
    %v1222 = vunpack.c.l.b16 %v1190
    %v1223 = vunpack.c.l.b16 %v1191
    %v1224 = vunpack.c.l.b16 %v1192
    %v1225 = vunpack.c.l.b16 %v1193
    %v1226 = vunpack.c.l.b16 %v1194
    %v1227 = vunpack.c.l.b16 %v1195
    %v1228 = vunpack.c.l.b16 %v1196
    %v1229 = vunpack.c.l.b16 %v1197
    %v1230 = vunpack.c.l.b16 %v1198
    %v1231 = vunpack.c.l.b16 %v1199
    %v1232 = vunpack.c.l.b16 %v1200
    %v1233 = vunpack.c.l.b16 %v1201
    %v1234 = vunpack.c.l.b16 %v1202
    %v1235 = vunpack.c.l.b16 %v1203
    %v1236 = vpack.c.b16 %v1221, %v1220
    %v1237 = vpack.c.b16 %v1223, %v1222
    %v1238 = vpack.c.b16 %v1225, %v1224
    %v1239 = vpack.c.b16 %v1227, %v1226
    %v1240 = vpack.c.b16 %v1229, %v1228
    %v1241 = vpack.c.b16 %v1231, %v1230
    %v1242 = vpack.c.b16 %v1233, %v1232
    %v1243 = vpack.c.b16 %v1235, %v1234
    %1252 = vmatpush.bf16.msra.mxu0 %v1243
    %1253 = vmatpush.bf16.msra.mxu0 %v1242
    %1254 = vmatpush.bf16.msra.mxu0 %v1241
    %1255 = vmatpush.bf16.msra.mxu0 %v1240
    %1256 = vmatpush.bf16.msra.mxu0 %v1239
    %1257 = vmatpush.bf16.msra.mxu0 %v1238
    %1258 = vmatpush.bf16.msra.mxu0 %v1237
    %1259 = vmatpush.bf16.msra.mxu0 %v1236
    %1260 = vmatmul.bf16.gmra.mxu0 %v1187
    %v1261 = vpop.f32.mrf.mxu0
    %v1262 = vadd.f32 %v208, %v1261
    %v1263 = vpop.f32.mrf.mxu0
    %v1264 = vadd.f32 %v209, %v1263
    %1265 = vdwg.mxu0
    %v1266 = vmul.f32 %v1262, %v1262
    %v1267 = vmul.f32 %v1264, %v1264
    %1268 = vadd.xlane.f32.xlu0 %v1266
    %v1269 = vpop.xlane.xlu0 %1268
    %1270 = vadd.xlane.f32.xlu0 %v1267
    %v1271 = vpop.xlane.xlu0 %1270
    %v1272 = vmul.f32 %v1269, %v222
    %v1273 = vmul.f32 %v1271, %v222
    %v1274 = vadd.f32 %v1272, 1e-05
    %v1275 = vadd.f32 %v1273, 1e-05
    %v1276 = vrsqrt.pop %v1274
    %v1277 = vmul.f32 %v1276, %v1274
    %v1278 = vmul.f32 %v1277, %v1276
    %v1279 = vmul.f32 0.5, %v1278
    %v1280 = vsub.f32 1.5, %v1279
    %v1281 = vmul.f32 %v1276, %v1280
    %vm1282 = vweird.f32 %v1274
    %vm1283 = vweird.f32 %v1276
    %vm1284 = vmor %vm1282, %vm1283
    %v1285 = vsel %vm1284, %v1276, %v1281
    %v1286 = vrsqrt.pop %v1275
    %v1287 = vmul.f32 %v1286, %v1275
    %v1288 = vmul.f32 %v1287, %v1286
    %v1289 = vmul.f32 0.5, %v1288
    %v1290 = vsub.f32 1.5, %v1289
    %v1291 = vmul.f32 %v1286, %v1290
    %vm1292 = vweird.f32 %v1275
    %vm1293 = vweird.f32 %v1286
    %vm1294 = vmor %vm1292, %vm1293
    %v1295 = vsel %vm1294, %v1286, %v1291
    %v1296 = vmul.f32 %v1262, %v1285
    %v1297 = vmul.f32 %v1264, %v1295
    %v1298 = vld [vmem:[%s8] sm:$0x1]
    %v1300 = vperm.slane %v1298, 0
    %v1302 = vmul.f32 %v1296, %v1300
    %v1303 = vmul.f32 %v1297, %v1300
    %v1304 = vpack.c.bf16 %v1303, %v1302
    %v1305 = vld [vmem:[#allocation16] sm:$0xff]
    %v1306 = vld [vmem:[#allocation16 + $0x8] sm:$0xff]
    %v1307 = vld [vmem:[#allocation16 + $0x10] sm:$0xff]
    %v1308 = vld [vmem:[#allocation16 + $0x18] sm:$0xff]
    %v1309 = vld [vmem:[#allocation16 + $0x20] sm:$0xff]
    %v1310 = vld [vmem:[#allocation16 + $0x28] sm:$0xff]
    %v1311 = vld [vmem:[#allocation16 + $0x30] sm:$0xff]
    %v1312 = vld [vmem:[#allocation16 + $0x38] sm:$0xff]
    %v1313 = vld [vmem:[#allocation16 + $0x40] sm:$0xff]
    %v1314 = vld [vmem:[#allocation16 + $0x48] sm:$0xff]
    %v1315 = vld [vmem:[#allocation16 + $0x50] sm:$0xff]
    %v1316 = vld [vmem:[#allocation16 + $0x58] sm:$0xff]
    %v1317 = vld [vmem:[#allocation16 + $0x60] sm:$0xff]
    %v1318 = vld [vmem:[#allocation16 + $0x68] sm:$0xff]
    %v1319 = vld [vmem:[#allocation16 + $0x70] sm:$0xff]
    %v1320 = vld [vmem:[#allocation16 + $0x78] sm:$0xff]
    %v1337 = vunpack.c.l.b16 %v1305
    %v1338 = vunpack.c.h.b16 %v1305
    %v1339 = vunpack.c.l.b16 %v1306
    %v1340 = vunpack.c.h.b16 %v1306
    %v1341 = vunpack.c.l.b16 %v1307
    %v1342 = vunpack.c.h.b16 %v1307
    %v1343 = vunpack.c.l.b16 %v1308
    %v1344 = vunpack.c.h.b16 %v1308
    %v1345 = vunpack.c.l.b16 %v1309
    %v1346 = vunpack.c.h.b16 %v1309
    %v1347 = vunpack.c.l.b16 %v1310
    %v1348 = vunpack.c.h.b16 %v1310
    %v1349 = vunpack.c.l.b16 %v1311
    %v1350 = vunpack.c.h.b16 %v1311
    %v1351 = vunpack.c.l.b16 %v1312
    %v1352 = vunpack.c.h.b16 %v1312
    %v1353 = vunpack.c.l.b16 %v1313
    %v1354 = vunpack.c.h.b16 %v1313
    %v1355 = vunpack.c.l.b16 %v1314
    %v1356 = vunpack.c.h.b16 %v1314
    %v1357 = vunpack.c.l.b16 %v1315
    %v1358 = vunpack.c.h.b16 %v1315
    %v1359 = vunpack.c.l.b16 %v1316
    %v1360 = vunpack.c.h.b16 %v1316
    %v1361 = vunpack.c.l.b16 %v1317
    %v1362 = vunpack.c.h.b16 %v1317
    %v1363 = vunpack.c.l.b16 %v1318
    %v1364 = vunpack.c.h.b16 %v1318
    %v1365 = vunpack.c.l.b16 %v1319
    %v1366 = vunpack.c.h.b16 %v1319
    %v1367 = vunpack.c.l.b16 %v1320
    %v1368 = vunpack.c.h.b16 %v1320
    %v1369 = vpack.c.b16 %v1339, %v1337
    %v1370 = vpack.c.b16 %v1340, %v1338
    %v1371 = vpack.c.b16 %v1343, %v1341
    %v1372 = vpack.c.b16 %v1344, %v1342
    %v1373 = vpack.c.b16 %v1347, %v1345
    %v1374 = vpack.c.b16 %v1348, %v1346
    %v1375 = vpack.c.b16 %v1351, %v1349
    %v1376 = vpack.c.b16 %v1352, %v1350
    %v1377 = vpack.c.b16 %v1355, %v1353
    %v1378 = vpack.c.b16 %v1356, %v1354
    %v1379 = vpack.c.b16 %v1359, %v1357
    %v1380 = vpack.c.b16 %v1360, %v1358
    %v1381 = vpack.c.b16 %v1363, %v1361
    %v1382 = vpack.c.b16 %v1364, %v1362
    %v1383 = vpack.c.b16 %v1367, %v1365
    %v1384 = vpack.c.b16 %v1368, %v1366
    %1401 = vmatpush.bf16.msra.mxu0 %v1383
    %1402 = vmatpush.bf16.msra.mxu0 %v1381
    %1403 = vmatpush.bf16.msra.mxu0 %v1379
    %1404 = vmatpush.bf16.msra.mxu0 %v1377
    %1405 = vmatpush.bf16.msra.mxu0 %v1375
    %1406 = vmatpush.bf16.msra.mxu0 %v1373
    %1407 = vmatpush.bf16.msra.mxu0 %v1371
    %1408 = vmatpush.bf16.msra.mxu0 %v1369
    %1409 = vmatmul.bf16.gmra.mxu0 %v1304
    %v1410 = vpop.f32.mrf.mxu0
    %v1411 = vadd.f32 0.0, %v1410
    %v1412 = vpop.f32.mrf.mxu0
    %v1413 = vadd.f32 0.0, %v1412
    %1414 = vdwg.mxu0
    %1415 = vmatpush.bf16.msra.mxu0 %v1384
    %1416 = vmatpush.bf16.msra.mxu0 %v1382
    %1417 = vmatpush.bf16.msra.mxu0 %v1380
    %1418 = vmatpush.bf16.msra.mxu0 %v1378
    %1419 = vmatpush.bf16.msra.mxu0 %v1376
    %1420 = vmatpush.bf16.msra.mxu0 %v1374
    %1421 = vmatpush.bf16.msra.mxu0 %v1372
    %1422 = vmatpush.bf16.msra.mxu0 %v1370
    %1423 = vmatmul.bf16.gmra.mxu0 %v1304
    %v1424 = vpop.f32.mrf.mxu0
    %v1425 = vadd.f32 0.0, %v1424
    %v1426 = vpop.f32.mrf.mxu0
    %v1427 = vadd.f32 0.0, %v1426
    %1428 = vdwg.mxu0
    %v1429 = vld [vmem:[#allocation17] sm:$0xff]
    %v1430 = vld [vmem:[#allocation17 + $0x8] sm:$0xff]
    %v1431 = vld [vmem:[#allocation17 + $0x10] sm:$0xff]
    %v1432 = vld [vmem:[#allocation17 + $0x18] sm:$0xff]
    %v1433 = vld [vmem:[#allocation17 + $0x20] sm:$0xff]
    %v1434 = vld [vmem:[#allocation17 + $0x28] sm:$0xff]
    %v1435 = vld [vmem:[#allocation17 + $0x30] sm:$0xff]
    %v1436 = vld [vmem:[#allocation17 + $0x38] sm:$0xff]
    %v1437 = vld [vmem:[#allocation17 + $0x40] sm:$0xff]
    %v1438 = vld [vmem:[#allocation17 + $0x48] sm:$0xff]
    %v1439 = vld [vmem:[#allocation17 + $0x50] sm:$0xff]
    %v1440 = vld [vmem:[#allocation17 + $0x58] sm:$0xff]
    %v1441 = vld [vmem:[#allocation17 + $0x60] sm:$0xff]
    %v1442 = vld [vmem:[#allocation17 + $0x68] sm:$0xff]
    %v1443 = vld [vmem:[#allocation17 + $0x70] sm:$0xff]
    %v1444 = vld [vmem:[#allocation17 + $0x78] sm:$0xff]
    %v1461 = vunpack.c.l.b16 %v1429
    %v1462 = vunpack.c.h.b16 %v1429
    %v1463 = vunpack.c.l.b16 %v1430
    %v1464 = vunpack.c.h.b16 %v1430
    %v1465 = vunpack.c.l.b16 %v1431
    %v1466 = vunpack.c.h.b16 %v1431
    %v1467 = vunpack.c.l.b16 %v1432
    %v1468 = vunpack.c.h.b16 %v1432
    %v1469 = vunpack.c.l.b16 %v1433
    %v1470 = vunpack.c.h.b16 %v1433
    %v1471 = vunpack.c.l.b16 %v1434
    %v1472 = vunpack.c.h.b16 %v1434
    %v1473 = vunpack.c.l.b16 %v1435
    %v1474 = vunpack.c.h.b16 %v1435
    %v1475 = vunpack.c.l.b16 %v1436
    %v1476 = vunpack.c.h.b16 %v1436
    %v1477 = vunpack.c.l.b16 %v1437
    %v1478 = vunpack.c.h.b16 %v1437
    %v1479 = vunpack.c.l.b16 %v1438
    %v1480 = vunpack.c.h.b16 %v1438
    %v1481 = vunpack.c.l.b16 %v1439
    %v1482 = vunpack.c.h.b16 %v1439
    %v1483 = vunpack.c.l.b16 %v1440
    %v1484 = vunpack.c.h.b16 %v1440
    %v1485 = vunpack.c.l.b16 %v1441
    %v1486 = vunpack.c.h.b16 %v1441
    %v1487 = vunpack.c.l.b16 %v1442
    %v1488 = vunpack.c.h.b16 %v1442
    %v1489 = vunpack.c.l.b16 %v1443
    %v1490 = vunpack.c.h.b16 %v1443
    %v1491 = vunpack.c.l.b16 %v1444
    %v1492 = vunpack.c.h.b16 %v1444
    %v1493 = vpack.c.b16 %v1463, %v1461
    %v1494 = vpack.c.b16 %v1464, %v1462
    %v1495 = vpack.c.b16 %v1467, %v1465
    %v1496 = vpack.c.b16 %v1468, %v1466
    %v1497 = vpack.c.b16 %v1471, %v1469
    %v1498 = vpack.c.b16 %v1472, %v1470
    %v1499 = vpack.c.b16 %v1475, %v1473
    %v1500 = vpack.c.b16 %v1476, %v1474
    %v1501 = vpack.c.b16 %v1479, %v1477
    %v1502 = vpack.c.b16 %v1480, %v1478
    %v1503 = vpack.c.b16 %v1483, %v1481
    %v1504 = vpack.c.b16 %v1484, %v1482
    %v1505 = vpack.c.b16 %v1487, %v1485
    %v1506 = vpack.c.b16 %v1488, %v1486
    %v1507 = vpack.c.b16 %v1491, %v1489
    %v1508 = vpack.c.b16 %v1492, %v1490
    %1525 = vmatpush.bf16.msra.mxu0 %v1507
    %1526 = vmatpush.bf16.msra.mxu0 %v1505
    %1527 = vmatpush.bf16.msra.mxu0 %v1503
    %1528 = vmatpush.bf16.msra.mxu0 %v1501
    %1529 = vmatpush.bf16.msra.mxu0 %v1499
    %1530 = vmatpush.bf16.msra.mxu0 %v1497
    %1531 = vmatpush.bf16.msra.mxu0 %v1495
    %1532 = vmatpush.bf16.msra.mxu0 %v1493
    %1533 = vmatmul.bf16.gmra.mxu0 %v1304
    %v1534 = vpop.f32.mrf.mxu0
    %v1535 = vadd.f32 0.0, %v1534
    %v1536 = vpop.f32.mrf.mxu0
    %v1537 = vadd.f32 0.0, %v1536
    %1538 = vdwg.mxu0
    %1539 = vmatpush.bf16.msra.mxu0 %v1508
    %1540 = vmatpush.bf16.msra.mxu0 %v1506
    %1541 = vmatpush.bf16.msra.mxu0 %v1504
    %1542 = vmatpush.bf16.msra.mxu0 %v1502
    %1543 = vmatpush.bf16.msra.mxu0 %v1500
    %1544 = vmatpush.bf16.msra.mxu0 %v1498
    %1545 = vmatpush.bf16.msra.mxu0 %v1496
    %1546 = vmatpush.bf16.msra.mxu0 %v1494
    %1547 = vmatmul.bf16.gmra.mxu0 %v1304
    %v1548 = vpop.f32.mrf.mxu0
    %v1549 = vadd.f32 0.0, %v1548
    %v1550 = vpop.f32.mrf.mxu0
    %v1551 = vadd.f32 0.0, %v1550
    %1552 = vdwg.mxu0
    %v1553 = vxor.u32 %v1411, 2147483648
    %v1554 = vxor.u32 %v1425, 2147483648
    %v1555 = vxor.u32 %v1413, 2147483648
    %v1556 = vxor.u32 %v1427, 2147483648
    %v1557 = vmul.f32 %v1553, 1.442695
    %v1558 = vpow.pop %v1557
    %v1559 = vmul.f32 %v1554, 1.442695
    %v1560 = vpow.pop %v1559
    %v1561 = vmul.f32 %v1555, 1.442695
    %v1562 = vpow.pop %v1561
    %v1563 = vmul.f32 %v1556, 1.442695
    %v1564 = vpow.pop %v1563
    %v1565 = vadd.f32 %v1558, 1.0
    %v1566 = vadd.f32 %v1560, 1.0
    %v1567 = vadd.f32 %v1562, 1.0
    %v1568 = vadd.f32 %v1564, 1.0
    %v1569 = vrcp.pop %v1565
    %v1570 = vmul.f32 %v1565, %v1569
    %v1571 = vsub.f32 1.0, %v1570
    %v1572 = vmul.f32 %v1569, %v1571
    %v1573 = vadd.f32 %v1569, %v1572
    %vm1574 = vweird.f32 %v1565
    %vm1575 = vweird.f32 %v1569
    %vm1576 = vmor %vm1574, %vm1575
    %v1577 = vsel %vm1576, %v1569, %v1573
    %v1578 = vand.u32 2147483647, %v1565
    %vm1579 = vcmp.eq.f32.partialorder %v1578, 8.507059e+37
    %v1580 = vand.u32 %v1565, 2147483648
    %v1581 = vor.u32 1.1754944e-38, %v1580
    %v1582 = vsel %vm1579, %v1581, %v1577
    %v1583 = vmul.f32 1.0, %v1582
    %v1584 = vrcp.pop %v1566
    %v1585 = vmul.f32 %v1566, %v1584
    %v1586 = vsub.f32 1.0, %v1585
    %v1587 = vmul.f32 %v1584, %v1586
    %v1588 = vadd.f32 %v1584, %v1587
    %vm1589 = vweird.f32 %v1566
    %vm1590 = vweird.f32 %v1584
    %vm1591 = vmor %vm1589, %vm1590
    %v1592 = vsel %vm1591, %v1584, %v1588
    %v1593 = vand.u32 2147483647, %v1566
    %vm1594 = vcmp.eq.f32.partialorder %v1593, 8.507059e+37
    %v1595 = vand.u32 %v1566, 2147483648
    %v1596 = vor.u32 1.1754944e-38, %v1595
    %v1597 = vsel %vm1594, %v1596, %v1592
    %v1598 = vmul.f32 1.0, %v1597
    %v1599 = vrcp.pop %v1567
    %v1600 = vmul.f32 %v1567, %v1599
    %v1601 = vsub.f32 1.0, %v1600
    %v1602 = vmul.f32 %v1599, %v1601
    %v1603 = vadd.f32 %v1599, %v1602
    %vm1604 = vweird.f32 %v1567
    %vm1605 = vweird.f32 %v1599
    %vm1606 = vmor %vm1604, %vm1605
    %v1607 = vsel %vm1606, %v1599, %v1603
    %v1608 = vand.u32 2147483647, %v1567
    %vm1609 = vcmp.eq.f32.partialorder %v1608, 8.507059e+37
    %v1610 = vand.u32 %v1567, 2147483648
    %v1611 = vor.u32 1.1754944e-38, %v1610
    %v1612 = vsel %vm1609, %v1611, %v1607
    %v1613 = vmul.f32 1.0, %v1612
    %v1614 = vrcp.pop %v1568
    %v1615 = vmul.f32 %v1568, %v1614
    %v1616 = vsub.f32 1.0, %v1615
    %v1617 = vmul.f32 %v1614, %v1616
    %v1618 = vadd.f32 %v1614, %v1617
    %vm1619 = vweird.f32 %v1568
    %vm1620 = vweird.f32 %v1614
    %vm1621 = vmor %vm1619, %vm1620
    %v1622 = vsel %vm1621, %v1614, %v1618
    %v1623 = vand.u32 2147483647, %v1568
    %vm1624 = vcmp.eq.f32.partialorder %v1623, 8.507059e+37
    %v1625 = vand.u32 %v1568, 2147483648
    %v1626 = vor.u32 1.1754944e-38, %v1625
    %v1627 = vsel %vm1624, %v1626, %v1622
    %v1628 = vmul.f32 1.0, %v1627
    %v1629 = vmul.f32 %v1411, %v1583
    %v1630 = vmul.f32 %v1425, %v1598
    %v1631 = vmul.f32 %v1413, %v1613
    %v1632 = vmul.f32 %v1427, %v1628
    %v1633 = vmul.f32 %v1629, %v1535
    %v1634 = vmul.f32 %v1630, %v1549
    %v1635 = vmul.f32 %v1631, %v1537
    %v1636 = vmul.f32 %v1632, %v1551
    %v1637 = vpack.c.bf16 %v1635, %v1633
    %v1638 = vpack.c.bf16 %v1636, %v1634
    %v1639 = vld [vmem:[#allocation19] sm:$0xf]
    %v1640 = vld [vmem:[#allocation19 + $0x4] sm:$0xf]
    %v1641 = vld [vmem:[#allocation19 + $0x8] sm:$0xf]
    %v1642 = vld [vmem:[#allocation19 + $0xc] sm:$0xf]
    %v1643 = vld [vmem:[#allocation19 + $0x10] sm:$0xf]
    %v1644 = vld [vmem:[#allocation19 + $0x14] sm:$0xf]
    %v1645 = vld [vmem:[#allocation19 + $0x18] sm:$0xf]
    %v1646 = vld [vmem:[#allocation19 + $0x1c] sm:$0xf]
    %v1647 = vld [vmem:[#allocation19 + $0x20] sm:$0xf]
    %v1648 = vld [vmem:[#allocation19 + $0x24] sm:$0xf]
    %v1649 = vld [vmem:[#allocation19 + $0x28] sm:$0xf]
    %v1650 = vld [vmem:[#allocation19 + $0x2c] sm:$0xf]
    %v1651 = vld [vmem:[#allocation19 + $0x30] sm:$0xf]
    %v1652 = vld [vmem:[#allocation19 + $0x34] sm:$0xf]
    %v1653 = vld [vmem:[#allocation19 + $0x38] sm:$0xf]
    %v1654 = vld [vmem:[#allocation19 + $0x3c] sm:$0xf]
    %v1655 = vld [vmem:[#allocation19 + $0x40] sm:$0xf]
    %v1656 = vld [vmem:[#allocation19 + $0x44] sm:$0xf]
    %v1657 = vld [vmem:[#allocation19 + $0x48] sm:$0xf]
    %v1658 = vld [vmem:[#allocation19 + $0x4c] sm:$0xf]
    %v1659 = vld [vmem:[#allocation19 + $0x50] sm:$0xf]
    %v1660 = vld [vmem:[#allocation19 + $0x54] sm:$0xf]
    %v1661 = vld [vmem:[#allocation19 + $0x58] sm:$0xf]
    %v1662 = vld [vmem:[#allocation19 + $0x5c] sm:$0xf]
    %v1663 = vld [vmem:[#allocation19 + $0x60] sm:$0xf]
    %v1664 = vld [vmem:[#allocation19 + $0x64] sm:$0xf]
    %v1665 = vld [vmem:[#allocation19 + $0x68] sm:$0xf]
    %v1666 = vld [vmem:[#allocation19 + $0x6c] sm:$0xf]
    %v1667 = vld [vmem:[#allocation19 + $0x70] sm:$0xf]
    %v1668 = vld [vmem:[#allocation19 + $0x74] sm:$0xf]
    %v1669 = vld [vmem:[#allocation19 + $0x78] sm:$0xf]
    %v1670 = vld [vmem:[#allocation19 + $0x7c] sm:$0xf]
    %v1703 = vunpack.c.l.b16 %v1639
    %v1704 = vunpack.c.l.b16 %v1640
    %v1705 = vunpack.c.l.b16 %v1641
    %v1706 = vunpack.c.l.b16 %v1642
    %v1707 = vunpack.c.l.b16 %v1643
    %v1708 = vunpack.c.l.b16 %v1644
    %v1709 = vunpack.c.l.b16 %v1645
    %v1710 = vunpack.c.l.b16 %v1646
    %v1711 = vunpack.c.l.b16 %v1647
    %v1712 = vunpack.c.l.b16 %v1648
    %v1713 = vunpack.c.l.b16 %v1649
    %v1714 = vunpack.c.l.b16 %v1650
    %v1715 = vunpack.c.l.b16 %v1651
    %v1716 = vunpack.c.l.b16 %v1652
    %v1717 = vunpack.c.l.b16 %v1653
    %v1718 = vunpack.c.l.b16 %v1654
    %v1719 = vunpack.c.l.b16 %v1655
    %v1720 = vunpack.c.l.b16 %v1656
    %v1721 = vunpack.c.l.b16 %v1657
    %v1722 = vunpack.c.l.b16 %v1658
    %v1723 = vunpack.c.l.b16 %v1659
    %v1724 = vunpack.c.l.b16 %v1660
    %v1725 = vunpack.c.l.b16 %v1661
    %v1726 = vunpack.c.l.b16 %v1662
    %v1727 = vunpack.c.l.b16 %v1663
    %v1728 = vunpack.c.l.b16 %v1664
    %v1729 = vunpack.c.l.b16 %v1665
    %v1730 = vunpack.c.l.b16 %v1666
    %v1731 = vunpack.c.l.b16 %v1667
    %v1732 = vunpack.c.l.b16 %v1668
    %v1733 = vunpack.c.l.b16 %v1669
    %v1734 = vunpack.c.l.b16 %v1670
    %v1735 = vpack.c.b16 %v1704, %v1703
    %v1736 = vpack.c.b16 %v1706, %v1705
    %v1737 = vpack.c.b16 %v1708, %v1707
    %v1738 = vpack.c.b16 %v1710, %v1709
    %v1739 = vpack.c.b16 %v1712, %v1711
    %v1740 = vpack.c.b16 %v1714, %v1713
    %v1741 = vpack.c.b16 %v1716, %v1715
    %v1742 = vpack.c.b16 %v1718, %v1717
    %v1743 = vpack.c.b16 %v1720, %v1719
    %v1744 = vpack.c.b16 %v1722, %v1721
    %v1745 = vpack.c.b16 %v1724, %v1723
    %v1746 = vpack.c.b16 %v1726, %v1725
    %v1747 = vpack.c.b16 %v1728, %v1727
    %v1748 = vpack.c.b16 %v1730, %v1729
    %v1749 = vpack.c.b16 %v1732, %v1731
    %v1750 = vpack.c.b16 %v1734, %v1733
    %1767 = vmatpush.bf16.msra.mxu0 %v1742
    %1768 = vmatpush.bf16.msra.mxu0 %v1741
    %1769 = vmatpush.bf16.msra.mxu0 %v1740
    %1770 = vmatpush.bf16.msra.mxu0 %v1739
    %1771 = vmatpush.bf16.msra.mxu0 %v1738
    %1772 = vmatpush.bf16.msra.mxu0 %v1737
    %1773 = vmatpush.bf16.msra.mxu0 %v1736
    %1774 = vmatpush.bf16.msra.mxu0 %v1735
    %1775 = vmatmul.bf16.gmra.mxu0 %v1637
    %v1776 = vpop.f32.mrf.mxu0
    %v1777 = vadd.f32 %v1262, %v1776
    %v1778 = vpop.f32.mrf.mxu0
    %v1779 = vadd.f32 %v1264, %v1778
    %1780 = vdwg.mxu0
    %1781 = vmatpush.bf16.msra.mxu0 %v1750
    %1782 = vmatpush.bf16.msra.mxu0 %v1749
    %1783 = vmatpush.bf16.msra.mxu0 %v1748
    %1784 = vmatpush.bf16.msra.mxu0 %v1747
    %1785 = vmatpush.bf16.msra.mxu0 %v1746
    %1786 = vmatpush.bf16.msra.mxu0 %v1745
    %1787 = vmatpush.bf16.msra.mxu0 %v1744
    %1788 = vmatpush.bf16.msra.mxu0 %v1743
    %1789 = vmatmul.bf16.gmra.mxu0 %v1638
    %v1790 = vpop.f32.mrf.mxu0
    %v1791 = vadd.f32 %v1777, %v1790
    %v1792 = vpop.f32.mrf.mxu0
    %v1793 = vadd.f32 %v1779, %v1792
    %1794 = vdwg.mxu0
    %1795 = vst [vmem:[#allocation20] sm:$0xff] %v1791
    %1796 = vst [vmem:[#allocation20 + $0x8] sm:$0xff] %v1793
    // Predicated region
    $region94: #{tpu_custom_call.1} parent=1 // pred_check
      _
    $region95: #{tpu_custom_call.1} parent=1 // pred_check_branch
      %1798 = sbr.rel (0) target = $region97
    $region96: #{tpu_custom_call.1} parent=1 // pred_region
      %1800 = vsyncadd [#allocation4], 0
      %s1801 = sshll.u32 [#allocation20], 4
      %s1802 = int_to_ptr.vmem [resolvable:$true] %s1801
      %s1803 = sshll.u32 %s12, 4
      %s1804 = int_to_ptr.hbm [resolvable:$true] %s1803
      %1809 = dma.vmem_to_hbm [thread:$0]  %s1802, 256, %s1804, [#allocation4], 128, 128, 8
    $region97: #{tpu_custom_call.1} parent=1 // pred_fallthru
      _
    // Predicated region
    $region98: #{tpu_custom_call.1} parent=1 // pred_check
      _
    $region99: #{tpu_custom_call.1} parent=1 // pred_check_branch
      %1811 = sbr.rel (0) target = $region101
    $region100: #{tpu_custom_call.1} parent=1 // pred_region
      %1813 = dma.done [#allocation4], 256
    $region101: #{tpu_custom_call.1} parent=1 // pred_fallthru
      _
    %1814 = vsyncpa [#allocation3], 1
    %1815 = vsyncpa [#allocation6], 1
    %1816 = vsyncpa [#allocation9], 1
    %1817 = vsyncpa [#allocation12], 1
    %1818 = vsyncpa [#allocation15], 1
    %1819 = vsyncpa [#allocation18], 1
    %1820 = vsyncpa [#allocation4], 1

</llo_original>
